<compile_context>
chip_gen: v7x
topology: tpu7x:2x2x1
jax: 0.10.0
libtpu: 0.0.40
codegen_flags: <defaults>
</compile_context>

<pallas_src>
import math
import functools

import jax
import jax.numpy as jnp
from jax import lax
from jax.experimental import pallas as pl
from jax.experimental.pallas import tpu as pltpu


_LN_EPS = 1e-5  # PyTorch nn.LayerNorm default


def _layer_norm(x, gamma, beta):
    mu = jnp.mean(x, axis=-1, keepdims=True)
    var = jnp.mean(jnp.square(x - mu), axis=-1, keepdims=True)
    return (x - mu) * lax.rsqrt(var + _LN_EPS) * gamma + beta


def _gelu_tanh(x):
    c = 0.7978845608028654  # sqrt(2/pi)
    return 0.5 * x * (1.0 + jnp.tanh(c * (x + 0.044715 * x * x * x)))


def _transformer_block_kernel(
    x_ref,                         # (1, nq, D)  f32   one batch element per grid step
    g1_ref, beta1_ref,             # (1, D)      f32   ln_input
    wqkv_ref, bqkv_ref,            # (D, 3D) bf16 / (1, 3D) f32  fused QKV (Q pre-scaled)
    wo_ref, bo_ref,                # (D, D)  bf16 / (1, D)  f32  out_proj
    g2_ref, beta2_ref,             # (1, D)      f32   ln_output
    w1_ref, b1_ref,                # (D, H)  bf16 / (1, H)  f32  mlp fc1
    w2_ref, b2_ref,                # (H, D)  bf16 / (1, D)  f32  mlp fc2
    o_ref,                         # (1, nq, D)
    ocat_ref,                      # VMEM scratch (nq, D) f32: head-major attn output
    *, h, d_k, d_model,
):
    f32 = jnp.float32
    bf16 = jnp.bfloat16
    D = d_model

    x = x_ref[0].astype(f32)                                    # (nq, D)

    # ---------------- LayerNorm (ln_input), f32 ----------------
    ln1 = _layer_norm(x, g1_ref[...], beta1_ref[...])
    ln1_bf = ln1.astype(bf16)

    # ---------------- fused QKV projection (one MXU matmul) ----------------
    # Column layout of wqkv: [Q (head-major) | K | V]; 1/sqrt(d_k) folded into
    # the Q columns / bias at param-prep time.
    qkv = jnp.dot(ln1_bf, wqkv_ref[...], preferred_element_type=f32) + bqkv_ref[...]  # (nq, 3D)

    # head-stacked (h, nq, d_k) views; heads moved to an OUTER dim so the
    # attention core is two single-batch-dim einsums + one softmax pass.
    def head_stack(base):
        return jnp.stack(
            [qkv[:, base + hi * d_k: base + (hi + 1) * d_k] for hi in range(h)],
            axis=0).astype(bf16)                                 # (h, nq, d_k)

    q_s = head_stack(0)
    k_s = head_stack(D)
    v_s = head_stack(2 * D)

    # ---------------- attention core, head-batched ----------------
    s = jnp.einsum("hqd,hkd->hqk", q_s, k_s,
                   preferred_element_type=f32)                   # (h, nq, nk)
    m = jnp.max(s, axis=-1, keepdims=True)
    e = jnp.exp(s - m)
    p = e * pl.reciprocal(jnp.sum(e, axis=-1, keepdims=True), approx=True)

    o_h = jnp.einsum("hqk,hkd->hqd", p.astype(bf16), v_s,
                     preferred_element_type=f32)                 # (h, nq, d_k)

    # Relayout heads back into lanes via cheap static lane-sliced stores to a
    # VMEM scratch, then ONE output-projection matmul against the full Wo.
    for hi in range(h):
        ocat_ref[:, hi * d_k:(hi + 1) * d_k] = o_h[hi]
    attn = jnp.dot(ocat_ref[...].astype(bf16), wo_ref[...],
                   preferred_element_type=f32) + bo_ref[...]     # (nq, D)

    # ---------------- residual 1 ----------------
    x1 = x + attn

    # ---------------- LayerNorm (ln_output) + MLP ----------------
    ln2 = _layer_norm(x1, g2_ref[...], beta2_ref[...])
    h1 = jnp.dot(ln2.astype(bf16), w1_ref[...], preferred_element_type=f32) + b1_ref[...]
    h1 = _gelu_tanh(h1)                                          # f32 elementwise
    h2 = jnp.dot(h1.astype(bf16), w2_ref[...], preferred_element_type=f32) + b2_ref[...]

    # ---------------- residual 2 ----------------
    o_ref[0] = (x1 + h2).astype(o_ref.dtype)


def transformer_block(x, kp, *, h):
    """x: (b_s, nq, d_model).  kp: kernel-layout params from prepare_kernel_params()."""
    b_s, nq, d_model = x.shape
    d_k = d_model // h
    hidden = kp["w1"].shape[1]

    kernel = functools.partial(_transformer_block_kernel, h=h, d_k=d_k, d_model=d_model)

    def wspec(shape):
        # grid-invariant weight: whole array, constant block index
        nd = len(shape)
        return pl.BlockSpec(shape, lambda b, _nd=nd: (0,) * _nd)

    in_specs = [
        pl.BlockSpec((1, nq, d_model), lambda b: (b, 0, 0)),      # x (one batch element)
        wspec((1, d_model)), wspec((1, d_model)),                 # ln_input gamma / beta
        wspec((d_model, 3 * d_model)), wspec((1, 3 * d_model)),   # fused QKV (Q pre-scaled)
        wspec((d_model, d_model)), wspec((1, d_model)),           # out_proj
        wspec((1, d_model)), wspec((1, d_model)),                 # ln_output gamma / beta
        wspec((d_model, hidden)), wspec((1, hidden)),             # mlp fc1
        wspec((hidden, d_model)), wspec((1, d_model)),            # mlp fc2
    ]

    out = pl.pallas_call(
        kernel,
        out_shape=jax.ShapeDtypeStruct((b_s, nq, d_model), x.dtype),
        grid_spec=pltpu.PrefetchScalarGridSpec(
            num_scalar_prefetch=0,
            grid=(b_s,),                                          # per-batch grid step
            in_specs=in_specs,
            out_specs=pl.BlockSpec((1, nq, d_model), lambda b: (b, 0, 0)),
            scratch_shapes=[pltpu.VMEM((nq, d_model), jnp.float32)],
        ),
        compiler_params=pltpu.CompilerParams(
            # "parallel": v7x's 2 TensorCores split the batch; harmless on v5e/v6e.
            dimension_semantics=("parallel",),
        ),
    )(
        x,
        kp["g1"], kp["beta1"],
        kp["wqkv"], kp["bqkv"],
        kp["wo"], kp["bo"],
        kp["g2"], kp["beta2"],
        kp["w1"], kp["b1"], kp["w2"], kp["b2"],
    )
    return out


def init_params(key, d_model, block_exp):
    """Deterministic test params in PyTorch layout (Linear weight = (out, in)).

    Weight std 0.02 (instead of the module's 0.001 / zero-bias init) so the
    attention / MLP branch contributions are large enough to make the
    bf16-mixed-precision correctness check meaningful.
    """
    hidden = block_exp * d_model
    ks = jax.random.split(key, 10)
    std = 0.02

    def lin(k, out_dim, in_dim):
        kw, kb = jax.random.split(k)
        w = jax.random.normal(kw, (out_dim, in_dim), jnp.float32) * std
        b = jax.random.normal(kb, (out_dim,), jnp.float32) * std
        return w, b

    wq, bq = lin(ks[0], d_model, d_model)
    wk, bk = lin(ks[1], d_model, d_model)
    wv, bv = lin(ks[2], d_model, d_model)
    wo, bo = lin(ks[3], d_model, d_model)
    w1, b1 = lin(ks[4], hidden, d_model)
    w2, b2 = lin(ks[5], d_model, hidden)
    ln1_g = 1.0 + 0.1 * jax.random.normal(ks[6], (d_model,), jnp.float32)
    ln1_b = 0.1 * jax.random.normal(ks[7], (d_model,), jnp.float32)
    ln2_g = 1.0 + 0.1 * jax.random.normal(ks[8], (d_model,), jnp.float32)
    ln2_b = 0.1 * jax.random.normal(ks[9], (d_model,), jnp.float32)
    return dict(wq=wq, bq=bq, wk=wk, bk=bk, wv=wv, bv=bv, wo=wo, bo=bo,
                w1=w1, b1=b1, w2=w2, b2=b2,
                ln1_g=ln1_g, ln1_b=ln1_b, ln2_g=ln2_g, ln2_b=ln2_b)


def prepare_kernel_params(p, *, h):
    """One-off conversion to kernel layout: fused bf16 Wqkv (Q pre-scaled by
    1/sqrt(d_k)), lane-dense fused bias, bf16 out-proj / MLP weights."""
    d_model = p["ln1_g"].shape[0]
    d_k = d_model // h
    scale = 1.0 / math.sqrt(d_k)
    f32, bf16 = jnp.float32, jnp.bfloat16

    # PyTorch Linear weight is (out, in) -> kernel wants (in, out).
    # Column order within Q/K/V is already head-major (out idx = head*d_k + d).
    wqkv = jnp.concatenate(
        [p["wq"].T * scale, p["wk"].T, p["wv"].T], axis=1).astype(bf16)     # (D, 3D)
    bqkv = jnp.concatenate(
        [p["bq"] * scale, p["bk"], p["bv"]], axis=0).reshape(1, 3 * d_model).astype(f32)

    return dict(
        g1=p["ln1_g"].reshape(1, d_model).astype(f32),
        beta1=p["ln1_b"].reshape(1, d_model).astype(f32),
        wqkv=wqkv, bqkv=bqkv,
        wo=p["wo"].T.astype(bf16), bo=p["bo"].reshape(1, d_model).astype(f32),
        g2=p["ln2_g"].reshape(1, d_model).astype(f32),
        beta2=p["ln2_b"].reshape(1, d_model).astype(f32),
        w1=p["w1"].T.astype(bf16), b1=p["b1"].reshape(1, -1).astype(f32),
        w2=p["w2"].T.astype(bf16), b2=p["b2"].reshape(1, d_model).astype(f32),
    )


def transformer_block_ref(x, p, *, h):
    """Pure-JAX f32 reference matching the PyTorch forward (dropout = identity)."""
    b_s, nq, d_model = x.shape
    d_k = d_model // h

    def ln(y, g, b):
        mu = y.mean(-1, keepdims=True)
        var = ((y - mu) ** 2).mean(-1, keepdims=True)
        return (y - mu) / jnp.sqrt(var + _LN_EPS) * g + b

    y = ln(x, p["ln1_g"], p["ln1_b"])
    q = y @ p["wq"].T + p["bq"]
    k = y @ p["wk"].T + p["bk"]
    v = y @ p["wv"].T + p["bv"]
    q = q.reshape(b_s, nq, h, d_k).transpose(0, 2, 1, 3)      # (b, h, nq, dk)
    k = k.reshape(b_s, nq, h, d_k).transpose(0, 2, 3, 1)      # (b, h, dk, nk)
    v = v.reshape(b_s, nq, h, d_k).transpose(0, 2, 1, 3)      # (b, h, nk, dv)
    att = jnp.matmul(q, k) / jnp.sqrt(jnp.float32(d_k))
    att = jax.nn.softmax(att, axis=-1)
    sa = jnp.matmul(att, v).transpose(0, 2, 1, 3).reshape(b_s, nq, d_model)
    sa = sa @ p["wo"].T + p["bo"]
    x = x + sa

    y2 = ln(x, p["ln2_g"], p["ln2_b"])
    m1 = jax.nn.gelu(y2 @ p["w1"].T + p["b1"], approximate=False)  # PyTorch exact-erf GELU
    m2 = m1 @ p["w2"].T + p["b2"]
    return x + m2


if __name__ == "__main__":
    # Small shapes consistent with the module: d_model=32, h=4, seq=16, batch=2,
    # block_exp=4 (MLP hidden = 128).
    b_s, nq, d_model, h, block_exp = 2, 16, 32, 4, 4

    key = jax.random.PRNGKey(0)
    kx, kparam = jax.random.split(key)
    x = jax.random.normal(kx, (b_s, nq, d_model), jnp.float32)

    params = init_params(kparam, d_model, block_exp)
    kparams = prepare_kernel_params(params, h=h)

    out = transformer_block(x, kparams, h=h)
    out = jax.block_until_ready(out)

    ref = transformer_block_ref(x, params, h=h)
    assert out.shape == (b_s, nq, d_model)
    max_err = float(jnp.max(jnp.abs(out - ref)))
    assert jnp.allclose(out, ref, atol=2e-3, rtol=2e-3), (
        f"mismatch vs reference, max abs err {max_err}")

    print("KERNEL_OK")
</pallas_src>

<mosaic_0001>
module attributes {stable_mosaic.version = 11 : i64} {
  func.func @_transformer_block_kernel(%arg0: i32, %arg1: memref<1x16x32xf32, #tpu.memory_space<vmem>>, %arg2: memref<1x32xf32, #tpu.memory_space<vmem>>, %arg3: memref<1x32xf32, #tpu.memory_space<vmem>>, %arg4: memref<32x96xbf16, #tpu.memory_space<vmem>>, %arg5: memref<1x96xf32, #tpu.memory_space<vmem>>, %arg6: memref<32x32xbf16, #tpu.memory_space<vmem>>, %arg7: memref<1x32xf32, #tpu.memory_space<vmem>>, %arg8: memref<1x32xf32, #tpu.memory_space<vmem>>, %arg9: memref<1x32xf32, #tpu.memory_space<vmem>>, %arg10: memref<32x128xbf16, #tpu.memory_space<vmem>>, %arg11: memref<1x128xf32, #tpu.memory_space<vmem>>, %arg12: memref<128x32xbf16, #tpu.memory_space<vmem>>, %arg13: memref<1x32xf32, #tpu.memory_space<vmem>>, %arg14: memref<1x16x32xf32, #tpu.memory_space<vmem>>, %arg15: memref<16x32xf32, #tpu.memory_space<vmem>>) attributes {dimension_semantics = [#tpu.dimension_semantics<parallel>], iteration_bounds = array<i64: 2>, scalar_prefetch = 0 : i64, scratch_operands = 1 : i64, tpu.core_type = #tpu.core_type<tc>, window_params = [{transform_indices = @transform_0, window_bounds = array<i64: 1, 16, 32>}, {pipeline_mode = #tpu.pipeline_mode<synchronous>, transform_indices = @transform_1, window_bounds = array<i64: 1, 32>}, {pipeline_mode = #tpu.pipeline_mode<synchronous>, transform_indices = @transform_2, window_bounds = array<i64: 1, 32>}, {pipeline_mode = #tpu.pipeline_mode<synchronous>, transform_indices = @transform_3, window_bounds = array<i64: 32, 96>}, {pipeline_mode = #tpu.pipeline_mode<synchronous>, transform_indices = @transform_4, window_bounds = array<i64: 1, 96>}, {pipeline_mode = #tpu.pipeline_mode<synchronous>, transform_indices = @transform_5, window_bounds = array<i64: 32, 32>}, {pipeline_mode = #tpu.pipeline_mode<synchronous>, transform_indices = @transform_6, window_bounds = array<i64: 1, 32>}, {pipeline_mode = #tpu.pipeline_mode<synchronous>, transform_indices = @transform_7, window_bounds = array<i64: 1, 32>}, {pipeline_mode = #tpu.pipeline_mode<synchronous>, transform_indices = @transform_8, window_bounds = array<i64: 1, 32>}, {pipeline_mode = #tpu.pipeline_mode<synchronous>, transform_indices = @transform_9, window_bounds = array<i64: 32, 128>}, {pipeline_mode = #tpu.pipeline_mode<synchronous>, transform_indices = @transform_10, window_bounds = array<i64: 1, 128>}, {pipeline_mode = #tpu.pipeline_mode<synchronous>, transform_indices = @transform_11, window_bounds = array<i64: 128, 32>}, {pipeline_mode = #tpu.pipeline_mode<synchronous>, transform_indices = @transform_12, window_bounds = array<i64: 1, 32>}, {transform_indices = @transform_13, window_bounds = array<i64: 1, 16, 32>}]} {
    %c0 = arith.constant 0 : index
    %c0_0 = arith.constant 0 : index
    %c0_1 = arith.constant 0 : index
    %0 = vector.load %arg1[%c0, %c0_0, %c0_1] : memref<1x16x32xf32, #tpu.memory_space<vmem>>, vector<1x16x32xf32>
    %1 = vector.shape_cast %0 : vector<1x16x32xf32> to vector<16x32xf32>
    %c0_2 = arith.constant 0 : index
    %c0_3 = arith.constant 0 : index
    %2 = vector.load %arg2[%c0_2, %c0_3] : memref<1x32xf32, #tpu.memory_space<vmem>>, vector<1x32xf32>
    %c0_4 = arith.constant 0 : index
    %c0_5 = arith.constant 0 : index
    %3 = vector.load %arg3[%c0_4, %c0_5] : memref<1x32xf32, #tpu.memory_space<vmem>>, vector<1x32xf32>
    %cst = arith.constant dense<0.000000e+00> : vector<16xf32>
    %4 = vector.multi_reduction <add>, %1, %cst [1] : vector<16x32xf32> to vector<16xf32>
    %5 = vector.shape_cast %4 : vector<16xf32> to vector<16x1xf32>
    %cst_6 = arith.constant 3.200000e+01 : f32
    %6 = vector.broadcast %cst_6 : f32 to vector<16x1xf32>
    %7 = arith.divf %5, %6 : vector<16x1xf32>
    %8 = vector.broadcast %7 : vector<16x1xf32> to vector<16x32xf32>
    %9 = arith.subf %1, %8 : vector<16x32xf32>
    %10 = arith.mulf %9, %9 : vector<16x32xf32>
    %cst_7 = arith.constant dense<0.000000e+00> : vector<16xf32>
    %11 = vector.multi_reduction <add>, %10, %cst_7 [1] : vector<16x32xf32> to vector<16xf32>
    %12 = vector.shape_cast %11 : vector<16xf32> to vector<16x1xf32>
    %cst_8 = arith.constant 3.200000e+01 : f32
    %13 = vector.broadcast %cst_8 : f32 to vector<16x1xf32>
    %14 = arith.divf %12, %13 : vector<16x1xf32>
    %15 = vector.broadcast %7 : vector<16x1xf32> to vector<16x32xf32>
    %16 = arith.subf %1, %15 : vector<16x32xf32>
    %cst_9 = arith.constant 9.99999974E-6 : f32
    %17 = vector.broadcast %cst_9 : f32 to vector<16x1xf32>
    %18 = arith.addf %14, %17 : vector<16x1xf32>
    %19 = math.rsqrt %18 : vector<16x1xf32>
    %20 = vector.broadcast %19 : vector<16x1xf32> to vector<16x32xf32>
    %21 = arith.mulf %16, %20 : vector<16x32xf32>
    %22 = vector.broadcast %2 : vector<1x32xf32> to vector<16x32xf32>
    %23 = arith.mulf %21, %22 : vector<16x32xf32>
    %24 = vector.broadcast %3 : vector<1x32xf32> to vector<16x32xf32>
    %25 = arith.addf %23, %24 : vector<16x32xf32>
    %26 = arith.truncf %25 : vector<16x32xf32> to vector<16x32xbf16>
    %c0_10 = arith.constant 0 : index
    %c0_11 = arith.constant 0 : index
    %27 = vector.load %arg4[%c0_10, %c0_11] : memref<32x96xbf16, #tpu.memory_space<vmem>>, vector<32x96xbf16>
    %cst_12 = arith.constant dense<0.000000e+00> : vector<16x96xf32>
    %28 = tpu.matmul %26, %27, %cst_12 {dimension_numbers = #tpu.dot_dimension_numbers<[1], [0], [0], [1], [0, 0, 1, 1], [], []>} : vector<16x32xbf16>, vector<32x96xbf16>, vector<16x96xf32> -> vector<16x96xf32>
    %c0_13 = arith.constant 0 : index
    %c0_14 = arith.constant 0 : index
    %29 = vector.load %arg5[%c0_13, %c0_14] : memref<1x96xf32, #tpu.memory_space<vmem>>, vector<1x96xf32>
    %30 = vector.broadcast %29 : vector<1x96xf32> to vector<16x96xf32>
    %31 = arith.addf %28, %30 : vector<16x96xf32>
    %32 = vector.extract_strided_slice %31 {offsets = [0, 0], sizes = [16, 8], strides = [1, 1]} : vector<16x96xf32> to vector<16x8xf32>
    %33 = vector.extract_strided_slice %31 {offsets = [0, 8], sizes = [16, 8], strides = [1, 1]} : vector<16x96xf32> to vector<16x8xf32>
    %34 = vector.extract_strided_slice %31 {offsets = [0, 16], sizes = [16, 8], strides = [1, 1]} : vector<16x96xf32> to vector<16x8xf32>
    %35 = vector.extract_strided_slice %31 {offsets = [0, 24], sizes = [16, 8], strides = [1, 1]} : vector<16x96xf32> to vector<16x8xf32>
    %36 = vector.shape_cast %32 : vector<16x8xf32> to vector<1x16x8xf32>
    %37 = vector.shape_cast %33 : vector<16x8xf32> to vector<1x16x8xf32>
    %38 = vector.shape_cast %34 : vector<16x8xf32> to vector<1x16x8xf32>
    %39 = vector.shape_cast %35 : vector<16x8xf32> to vector<1x16x8xf32>
    %40 = tpu.concatenate %36, %37, %38, %39 in 0 : vector<1x16x8xf32>, vector<1x16x8xf32>, vector<1x16x8xf32>, vector<1x16x8xf32> -> vector<4x16x8xf32>
    %41 = arith.truncf %40 : vector<4x16x8xf32> to vector<4x16x8xbf16>
    %42 = vector.extract_strided_slice %31 {offsets = [0, 32], sizes = [16, 8], strides = [1, 1]} : vector<16x96xf32> to vector<16x8xf32>
    %43 = vector.extract_strided_slice %31 {offsets = [0, 40], sizes = [16, 8], strides = [1, 1]} : vector<16x96xf32> to vector<16x8xf32>
    %44 = vector.extract_strided_slice %31 {offsets = [0, 48], sizes = [16, 8], strides = [1, 1]} : vector<16x96xf32> to vector<16x8xf32>
    %45 = vector.extract_strided_slice %31 {offsets = [0, 56], sizes = [16, 8], strides = [1, 1]} : vector<16x96xf32> to vector<16x8xf32>
    %46 = vector.shape_cast %42 : vector<16x8xf32> to vector<1x16x8xf32>
    %47 = vector.shape_cast %43 : vector<16x8xf32> to vector<1x16x8xf32>
    %48 = vector.shape_cast %44 : vector<16x8xf32> to vector<1x16x8xf32>
    %49 = vector.shape_cast %45 : vector<16x8xf32> to vector<1x16x8xf32>
    %50 = tpu.concatenate %46, %47, %48, %49 in 0 : vector<1x16x8xf32>, vector<1x16x8xf32>, vector<1x16x8xf32>, vector<1x16x8xf32> -> vector<4x16x8xf32>
    %51 = arith.truncf %50 : vector<4x16x8xf32> to vector<4x16x8xbf16>
    %52 = vector.extract_strided_slice %31 {offsets = [0, 64], sizes = [16, 8], strides = [1, 1]} : vector<16x96xf32> to vector<16x8xf32>
    %53 = vector.extract_strided_slice %31 {offsets = [0, 72], sizes = [16, 8], strides = [1, 1]} : vector<16x96xf32> to vector<16x8xf32>
    %54 = vector.extract_strided_slice %31 {offsets = [0, 80], sizes = [16, 8], strides = [1, 1]} : vector<16x96xf32> to vector<16x8xf32>
    %55 = vector.extract_strided_slice %31 {offsets = [0, 88], sizes = [16, 8], strides = [1, 1]} : vector<16x96xf32> to vector<16x8xf32>
    %56 = vector.shape_cast %52 : vector<16x8xf32> to vector<1x16x8xf32>
    %57 = vector.shape_cast %53 : vector<16x8xf32> to vector<1x16x8xf32>
    %58 = vector.shape_cast %54 : vector<16x8xf32> to vector<1x16x8xf32>
    %59 = vector.shape_cast %55 : vector<16x8xf32> to vector<1x16x8xf32>
    %60 = tpu.concatenate %56, %57, %58, %59 in 0 : vector<1x16x8xf32>, vector<1x16x8xf32>, vector<1x16x8xf32>, vector<1x16x8xf32> -> vector<4x16x8xf32>
    %61 = arith.truncf %60 : vector<4x16x8xf32> to vector<4x16x8xbf16>
    "tpu.trace_start"() <{level = 10 : i32, message = "hqd,hkd->hqk"}> : () -> ()
    %cst_15 = arith.constant dense<0.000000e+00> : vector<4x16x16xf32>
    %62 = tpu.matmul %41, %51, %cst_15 {dimension_numbers = #tpu.dot_dimension_numbers<[2], [2], [1], [1], [0, 0, 0, 1, 1, 1], [0], [0]>} : vector<4x16x8xbf16>, vector<4x16x8xbf16>, vector<4x16x16xf32> -> vector<4x16x16xf32>
    "tpu.trace_stop"() : () -> ()
    %cst_16 = arith.constant dense<0xFF800000> : vector<4x16xf32>
    %63 = vector.multi_reduction <maximumf>, %62, %cst_16 [2] : vector<4x16x16xf32> to vector<4x16xf32>
    %64 = vector.shape_cast %63 : vector<4x16xf32> to vector<4x16x1xf32>
    %65 = vector.broadcast %64 : vector<4x16x1xf32> to vector<4x16x16xf32>
    %66 = arith.subf %62, %65 : vector<4x16x16xf32>
    %67 = math.exp %66 : vector<4x16x16xf32>
    %cst_17 = arith.constant dense<0.000000e+00> : vector<4x16xf32>
    %68 = vector.multi_reduction <add>, %67, %cst_17 [2] : vector<4x16x16xf32> to vector<4x16xf32>
    %69 = vector.shape_cast %68 : vector<4x16xf32> to vector<4x16x1xf32>
    %70 = tpu.reciprocal %69 {approx = true} : vector<4x16x1xf32> -> vector<4x16x1xf32>
    %71 = vector.broadcast %70 : vector<4x16x1xf32> to vector<4x16x16xf32>
    %72 = arith.mulf %67, %71 : vector<4x16x16xf32>
    %73 = arith.truncf %72 : vector<4x16x16xf32> to vector<4x16x16xbf16>
    "tpu.trace_start"() <{level = 10 : i32, message = "hqk,hkd->hqd"}> : () -> ()
    %cst_18 = arith.constant dense<0.000000e+00> : vector<4x16x8xf32>
    %74 = tpu.matmul %73, %61, %cst_18 {dimension_numbers = #tpu.dot_dimension_numbers<[2], [1], [1], [2], [0, 0, 0, 1, 1, 2], [0], [0]>} : vector<4x16x16xbf16>, vector<4x16x8xbf16>, vector<4x16x8xf32> -> vector<4x16x8xf32>
    "tpu.trace_stop"() : () -> ()
    %75 = vector.extract_strided_slice %74 {offsets = [0, 0, 0], sizes = [1, 16, 8], strides = [1, 1, 1]} : vector<4x16x8xf32> to vector<1x16x8xf32>
    %76 = vector.shape_cast %75 : vector<1x16x8xf32> to vector<16x8xf32>
    %c0_19 = arith.constant 0 : index
    %c0_20 = arith.constant 0 : index
    %77 = vector.load %arg15[%c0_19, %c0_20] : memref<16x32xf32, #tpu.memory_space<vmem>>, vector<16x8xf32>
    tpu.vector_store %arg15[%c0_19, %c0_20], %76 {strides = array<i32>} : memref<16x32xf32, #tpu.memory_space<vmem>>, vector<16x8xf32>,
    %78 = vector.extract_strided_slice %74 {offsets = [1, 0, 0], sizes = [1, 16, 8], strides = [1, 1, 1]} : vector<4x16x8xf32> to vector<1x16x8xf32>
    %79 = vector.shape_cast %78 : vector<1x16x8xf32> to vector<16x8xf32>
    %c0_21 = arith.constant 0 : index
    %c8 = arith.constant 8 : index
    %80 = vector.load %arg15[%c0_21, %c8] : memref<16x32xf32, #tpu.memory_space<vmem>>, vector<16x8xf32>
    tpu.vector_store %arg15[%c0_21, %c8], %79 {strides = array<i32>} : memref<16x32xf32, #tpu.memory_space<vmem>>, vector<16x8xf32>,
    %81 = vector.extract_strided_slice %74 {offsets = [2, 0, 0], sizes = [1, 16, 8], strides = [1, 1, 1]} : vector<4x16x8xf32> to vector<1x16x8xf32>
    %82 = vector.shape_cast %81 : vector<1x16x8xf32> to vector<16x8xf32>
    %c0_22 = arith.constant 0 : index
    %c16 = arith.constant 16 : index
    %83 = vector.load %arg15[%c0_22, %c16] : memref<16x32xf32, #tpu.memory_space<vmem>>, vector<16x8xf32>
    tpu.vector_store %arg15[%c0_22, %c16], %82 {strides = array<i32>} : memref<16x32xf32, #tpu.memory_space<vmem>>, vector<16x8xf32>,
    %84 = vector.extract_strided_slice %74 {offsets = [3, 0, 0], sizes = [1, 16, 8], strides = [1, 1, 1]} : vector<4x16x8xf32> to vector<1x16x8xf32>
    %85 = vector.shape_cast %84 : vector<1x16x8xf32> to vector<16x8xf32>
    %c0_23 = arith.constant 0 : index
    %c24 = arith.constant 24 : index
    %86 = vector.load %arg15[%c0_23, %c24] : memref<16x32xf32, #tpu.memory_space<vmem>>, vector<16x8xf32>
    tpu.vector_store %arg15[%c0_23, %c24], %85 {strides = array<i32>} : memref<16x32xf32, #tpu.memory_space<vmem>>, vector<16x8xf32>,
    %c0_24 = arith.constant 0 : index
    %c0_25 = arith.constant 0 : index
    %87 = vector.load %arg15[%c0_24, %c0_25] : memref<16x32xf32, #tpu.memory_space<vmem>>, vector<16x32xf32>
    %88 = arith.truncf %87 : vector<16x32xf32> to vector<16x32xbf16>
    %c0_26 = arith.constant 0 : index
    %c0_27 = arith.constant 0 : index
    %89 = vector.load %arg6[%c0_26, %c0_27] : memref<32x32xbf16, #tpu.memory_space<vmem>>, vector<32x32xbf16>
    %cst_28 = arith.constant dense<0.000000e+00> : vector<16x32xf32>
    %90 = tpu.matmul %88, %89, %cst_28 {dimension_numbers = #tpu.dot_dimension_numbers<[1], [0], [0], [1], [0, 0, 1, 1], [], []>} : vector<16x32xbf16>, vector<32x32xbf16>, vector<16x32xf32> -> vector<16x32xf32>
    %c0_29 = arith.constant 0 : index
    %c0_30 = arith.constant 0 : index
    %91 = vector.load %arg7[%c0_29, %c0_30] : memref<1x32xf32, #tpu.memory_space<vmem>>, vector<1x32xf32>
    %92 = vector.broadcast %91 : vector<1x32xf32> to vector<16x32xf32>
    %93 = arith.addf %90, %92 : vector<16x32xf32>
    %94 = arith.addf %1, %93 : vector<16x32xf32>
    %c0_31 = arith.constant 0 : index
    %c0_32 = arith.constant 0 : index
    %95 = vector.load %arg8[%c0_31, %c0_32] : memref<1x32xf32, #tpu.memory_space<vmem>>, vector<1x32xf32>
    %c0_33 = arith.constant 0 : index
    %c0_34 = arith.constant 0 : index
    %96 = vector.load %arg9[%c0_33, %c0_34] : memref<1x32xf32, #tpu.memory_space<vmem>>, vector<1x32xf32>
    %cst_35 = arith.constant dense<0.000000e+00> : vector<16xf32>
    %97 = vector.multi_reduction <add>, %94, %cst_35 [1] : vector<16x32xf32> to vector<16xf32>
    %98 = vector.shape_cast %97 : vector<16xf32> to vector<16x1xf32>
    %cst_36 = arith.constant 3.200000e+01 : f32
    %99 = vector.broadcast %cst_36 : f32 to vector<16x1xf32>
    %100 = arith.divf %98, %99 : vector<16x1xf32>
    %101 = vector.broadcast %100 : vector<16x1xf32> to vector<16x32xf32>
    %102 = arith.subf %94, %101 : vector<16x32xf32>
    %103 = arith.mulf %102, %102 : vector<16x32xf32>
    %cst_37 = arith.constant dense<0.000000e+00> : vector<16xf32>
    %104 = vector.multi_reduction <add>, %103, %cst_37 [1] : vector<16x32xf32> to vector<16xf32>
    %105 = vector.shape_cast %104 : vector<16xf32> to vector<16x1xf32>
    %cst_38 = arith.constant 3.200000e+01 : f32
    %106 = vector.broadcast %cst_38 : f32 to vector<16x1xf32>
    %107 = arith.divf %105, %106 : vector<16x1xf32>
    %108 = vector.broadcast %100 : vector<16x1xf32> to vector<16x32xf32>
    %109 = arith.subf %94, %108 : vector<16x32xf32>
    %cst_39 = arith.constant 9.99999974E-6 : f32
    %110 = vector.broadcast %cst_39 : f32 to vector<16x1xf32>
    %111 = arith.addf %107, %110 : vector<16x1xf32>
    %112 = math.rsqrt %111 : vector<16x1xf32>
    %113 = vector.broadcast %112 : vector<16x1xf32> to vector<16x32xf32>
    %114 = arith.mulf %109, %113 : vector<16x32xf32>
    %115 = vector.broadcast %95 : vector<1x32xf32> to vector<16x32xf32>
    %116 = arith.mulf %114, %115 : vector<16x32xf32>
    %117 = vector.broadcast %96 : vector<1x32xf32> to vector<16x32xf32>
    %118 = arith.addf %116, %117 : vector<16x32xf32>
    %119 = arith.truncf %118 : vector<16x32xf32> to vector<16x32xbf16>
    %c0_40 = arith.constant 0 : index
    %c0_41 = arith.constant 0 : index
    %120 = vector.load %arg10[%c0_40, %c0_41] : memref<32x128xbf16, #tpu.memory_space<vmem>>, vector<32x128xbf16>
    %cst_42 = arith.constant dense<0.000000e+00> : vector<16x128xf32>
    %121 = tpu.matmul %119, %120, %cst_42 {dimension_numbers = #tpu.dot_dimension_numbers<[1], [0], [0], [1], [0, 0, 1, 1], [], []>} : vector<16x32xbf16>, vector<32x128xbf16>, vector<16x128xf32> -> vector<16x128xf32>
    %c0_43 = arith.constant 0 : index
    %c0_44 = arith.constant 0 : index
    %122 = vector.load %arg11[%c0_43, %c0_44] : memref<1x128xf32, #tpu.memory_space<vmem>>, vector<1x128xf32>
    %123 = vector.broadcast %122 : vector<1x128xf32> to vector<16x128xf32>
    %124 = arith.addf %121, %123 : vector<16x128xf32>
    %cst_45 = arith.constant 5.000000e-01 : f32
    %125 = vector.broadcast %cst_45 : f32 to vector<16x128xf32>
    %126 = arith.mulf %125, %124 : vector<16x128xf32>
    %cst_46 = arith.constant 4.471500e-02 : f32
    %127 = vector.broadcast %cst_46 : f32 to vector<16x128xf32>
    %128 = arith.mulf %127, %124 : vector<16x128xf32>
    %129 = arith.mulf %128, %124 : vector<16x128xf32>
    %130 = arith.mulf %129, %124 : vector<16x128xf32>
    %131 = arith.addf %124, %130 : vector<16x128xf32>
    %cst_47 = arith.constant 0.797884583 : f32
    %132 = vector.broadcast %cst_47 : f32 to vector<16x128xf32>
    %133 = arith.mulf %132, %131 : vector<16x128xf32>
    %134 = math.tanh %133 : vector<16x128xf32>
    %cst_48 = arith.constant 1.000000e+00 : f32
    %135 = vector.broadcast %cst_48 : f32 to vector<16x128xf32>
    %136 = arith.addf %135, %134 : vector<16x128xf32>
    %137 = arith.mulf %126, %136 : vector<16x128xf32>
    %138 = arith.truncf %137 : vector<16x128xf32> to vector<16x128xbf16>
    %c0_49 = arith.constant 0 : index
    %c0_50 = arith.constant 0 : index
    %139 = vector.load %arg12[%c0_49, %c0_50] : memref<128x32xbf16, #tpu.memory_space<vmem>>, vector<128x32xbf16>
    %cst_51 = arith.constant dense<0.000000e+00> : vector<16x32xf32>
    %140 = tpu.matmul %138, %139, %cst_51 {dimension_numbers = #tpu.dot_dimension_numbers<[1], [0], [0], [1], [0, 0, 1, 1], [], []>} : vector<16x128xbf16>, vector<128x32xbf16>, vector<16x32xf32> -> vector<16x32xf32>
    %c0_52 = arith.constant 0 : index
    %c0_53 = arith.constant 0 : index
    %141 = vector.load %arg13[%c0_52, %c0_53] : memref<1x32xf32, #tpu.memory_space<vmem>>, vector<1x32xf32>
    %142 = vector.broadcast %141 : vector<1x32xf32> to vector<16x32xf32>
    %143 = arith.addf %140, %142 : vector<16x32xf32>
    %144 = arith.addf %94, %143 : vector<16x32xf32>
    %c0_54 = arith.constant 0 : index
    %c0_55 = arith.constant 0 : index
    %c0_56 = arith.constant 0 : index
    %145 = vector.load %arg14[%c0_54, %c0_55, %c0_56] : memref<1x16x32xf32, #tpu.memory_space<vmem>>, vector<1x16x32xf32>
    %146 = vector.shape_cast %145 : vector<1x16x32xf32> to vector<16x32xf32>
    %147 = vector.shape_cast %144 : vector<16x32xf32> to vector<1x16x32xf32>
    tpu.vector_store %arg14[%c0_54, %c0_55, %c0_56], %147 {strides = array<i32>} : memref<1x16x32xf32, #tpu.memory_space<vmem>>, vector<1x16x32xf32>,
    return
  }
  func.func @transform_0(%arg0: i32) -> (i32, i32, i32) {
    %c0_i32 = arith.constant 0 : i32
    %c0_i32_0 = arith.constant 0 : i32
    %c0_i32_1 = arith.constant 0 : i32
    return %arg0, %c0_i32, %c0_i32_0 : i32, i32, i32
  }
  func.func @transform_1(%arg0: i32) -> (i32, i32) {
    %c0_i32 = arith.constant 0 : i32
    %c0_i32_0 = arith.constant 0 : i32
    %c0_i32_1 = arith.constant 0 : i32
    return %c0_i32, %c0_i32_0 : i32, i32
  }
  func.func @transform_2(%arg0: i32) -> (i32, i32) {
    %c0_i32 = arith.constant 0 : i32
    %c0_i32_0 = arith.constant 0 : i32
    %c0_i32_1 = arith.constant 0 : i32
    return %c0_i32, %c0_i32_0 : i32, i32
  }
  func.func @transform_3(%arg0: i32) -> (i32, i32) {
    %c0_i32 = arith.constant 0 : i32
    %c0_i32_0 = arith.constant 0 : i32
    %c0_i32_1 = arith.constant 0 : i32
    return %c0_i32, %c0_i32_0 : i32, i32
  }
  func.func @transform_4(%arg0: i32) -> (i32, i32) {
    %c0_i32 = arith.constant 0 : i32
    %c0_i32_0 = arith.constant 0 : i32
    %c0_i32_1 = arith.constant 0 : i32
    return %c0_i32, %c0_i32_0 : i32, i32
  }
  func.func @transform_5(%arg0: i32) -> (i32, i32) {
    %c0_i32 = arith.constant 0 : i32
    %c0_i32_0 = arith.constant 0 : i32
    %c0_i32_1 = arith.constant 0 : i32
    return %c0_i32, %c0_i32_0 : i32, i32
  }
  func.func @transform_6(%arg0: i32) -> (i32, i32) {
    %c0_i32 = arith.constant 0 : i32
    %c0_i32_0 = arith.constant 0 : i32
    %c0_i32_1 = arith.constant 0 : i32
    return %c0_i32, %c0_i32_0 : i32, i32
  }
  func.func @transform_7(%arg0: i32) -> (i32, i32) {
    %c0_i32 = arith.constant 0 : i32
    %c0_i32_0 = arith.constant 0 : i32
    %c0_i32_1 = arith.constant 0 : i32
    return %c0_i32, %c0_i32_0 : i32, i32
  }
  func.func @transform_8(%arg0: i32) -> (i32, i32) {
    %c0_i32 = arith.constant 0 : i32
    %c0_i32_0 = arith.constant 0 : i32
    %c0_i32_1 = arith.constant 0 : i32
    return %c0_i32, %c0_i32_0 : i32, i32
  }
  func.func @transform_9(%arg0: i32) -> (i32, i32) {
    %c0_i32 = arith.constant 0 : i32
    %c0_i32_0 = arith.constant 0 : i32
    %c0_i32_1 = arith.constant 0 : i32
    return %c0_i32, %c0_i32_0 : i32, i32
  }
  func.func @transform_10(%arg0: i32) -> (i32, i32) {
    %c0_i32 = arith.constant 0 : i32
    %c0_i32_0 = arith.constant 0 : i32
    %c0_i32_1 = arith.constant 0 : i32
    return %c0_i32, %c0_i32_0 : i32, i32
  }
  func.func @transform_11(%arg0: i32) -> (i32, i32) {
    %c0_i32 = arith.constant 0 : i32
    %c0_i32_0 = arith.constant 0 : i32
    %c0_i32_1 = arith.constant 0 : i32
    return %c0_i32, %c0_i32_0 : i32, i32
  }
  func.func @transform_12(%arg0: i32) -> (i32, i32) {
    %c0_i32 = arith.constant 0 : i32
    %c0_i32_0 = arith.constant 0 : i32
    %c0_i32_1 = arith.constant 0 : i32
    return %c0_i32, %c0_i32_0 : i32, i32
  }
  func.func @transform_13(%arg0: i32) -> (i32, i32, i32) {
    %c0_i32 = arith.constant 0 : i32
    %c0_i32_0 = arith.constant 0 : i32
    %c0_i32_1 = arith.constant 0 : i32
    return %arg0, %c0_i32, %c0_i32_0 : i32, i32, i32
  }
}

</mosaic_0001>

<llo_original>
// kernel: tpu_custom_call.1
$region0: #{tpu_custom_call.1}
  #allocation0 [shape = 'u32[]', space=smem, size = 0x4, offset = 0x4, fixed_abs, tag = 'smem constant byte address 0x4 - core index']
  #allocation1 [shape = 'u32[144,128]{1,0:T(1,128)}', space=vmem, size = 0x12000, scoped, tag = 'internal scratch']
  #allocation2 [shape = 'f32[16,32]{1,0:T(8,128)}', space=vmem, size = 0x2000, scoped, tag = 'scratch operand']
  %s0 = inlined_call_operand.vmem [shape: f32[2,16,32], index: 0, kind: input, shape index: {}]
  %s1 = inlined_call_operand.vmem [shape: f32[1,32], index: 1, kind: input, shape index: {}]
  %s2 = inlined_call_operand.vmem [shape: f32[1,32], index: 2, kind: input, shape index: {}]
  %s3 = inlined_call_operand.vmem [shape: bf16[32,96], index: 3, kind: input, shape index: {}]
  %s4 = inlined_call_operand.vmem [shape: f32[1,96], index: 4, kind: input, shape index: {}]
  %s5 = inlined_call_operand.vmem [shape: bf16[32,32], index: 5, kind: input, shape index: {}]
  %s6 = inlined_call_operand.vmem [shape: f32[1,32], index: 6, kind: input, shape index: {}]
  %s7 = inlined_call_operand.vmem [shape: f32[1,32], index: 7, kind: input, shape index: {}]
  %s8 = inlined_call_operand.vmem [shape: f32[1,32], index: 8, kind: input, shape index: {}]
  %s9 = inlined_call_operand.vmem [shape: bf16[32,128], index: 9, kind: input, shape index: {}]
  %s10 = inlined_call_operand.vmem [shape: f32[1,128], index: 10, kind: input, shape index: {}]
  %s11 = inlined_call_operand.vmem [shape: bf16[128,32], index: 11, kind: input, shape index: {}]
  %s12 = inlined_call_operand.vmem [shape: f32[1,32], index: 12, kind: input, shape index: {}]
  %s13 = inlined_call_operand.hbm [shape: f32[2,16,32], index: 13, kind: output, shape index: {}]
  %s14 = sld [smem:[#allocation0]]
  $region85: #{tpu_custom_call.1} parent=0
    _
  %s16 = ssub.s32 1, %s14
  %s17 = scalar_select 0, %s16, %s14
  $region1: #{tpu_custom_call.1} parent=0
    #allocation3 [shape = 'u8[16384]{0}', space=vmem, size = 0x4000, scoped, tag = 'output window, operand 0']
    #allocation4 [shape = 's32[2]{0}', space=sflag, size = 0x8, scoped, tag = 'scoped memory for tpu_custom_call.1']
    %18 = vsyncpa [#allocation4], 0
    %s19 = scalar_lea.sflag [#allocation4], 1
    %20 = vsyncpa %s19, 0
    loop: start=0, step=1, limit=4
    $region2: #{tpu_custom_call.1} parent=1 // loop_pre_header
      _
    $region3: #{tpu_custom_call.1} parent=1 // loop_header
      %s22 = sphi 0, %s26
      %p23 = scmp.ge.s32.totalorder %s22, 4
      %s32 = sphi 0, %s34
      %s35 = sphi 0, %s32
      %s36 = sphi 0, %s35
      %s52 = sphi 0, %s36
      %s56 = sphi 0, %s56
      %s58 = sphi 0, %s56
      %s59 = sphi 0, %s58
      %s73 = sphi 0, %s59
      %s77 = sphi 0, %s77
      %s79 = sphi 0, %s77
      %s80 = sphi 0, %s79
      %s94 = sphi 0, %s80
      %s98 = sphi 0, %s98
      %s100 = sphi 0, %s98
      %s101 = sphi 0, %s100
      %s115 = sphi 0, %s101
      %s119 = sphi 0, %s119
      %s121 = sphi 0, %s119
      %s122 = sphi 0, %s121
      %s136 = sphi 0, %s122
      %s140 = sphi 0, %s140
      %s142 = sphi 0, %s140
      %s143 = sphi 0, %s142
      %s157 = sphi 0, %s143
      %s161 = sphi 0, %s161
      %s163 = sphi 0, %s161
      %s164 = sphi 0, %s163
      %s178 = sphi 0, %s164
      %s182 = sphi 0, %s182
      %s184 = sphi 0, %s182
      %s185 = sphi 0, %s184
      %s199 = sphi 0, %s185
      %s203 = sphi 0, %s203
      %s205 = sphi 0, %s203
      %s206 = sphi 0, %s205
      %s220 = sphi 0, %s206
      %s224 = sphi 0, %s224
      %s226 = sphi 0, %s224
      %s227 = sphi 0, %s226
      %s241 = sphi 0, %s227
      %s245 = sphi 0, %s245
      %s247 = sphi 0, %s245
      %s248 = sphi 0, %s247
      %s262 = sphi 0, %s248
      %s266 = sphi 0, %s266
      %s268 = sphi 0, %s266
      %s269 = sphi 0, %s268
      %s283 = sphi 0, %s269
      %s287 = sphi 0, %s287
      %s289 = sphi 0, %s287
      %s290 = sphi 0, %s289
      %s304 = sphi 0, %s290
      %s310 = sphi 0, %s312
      %s313 = sphi 0, %s310
      %s314 = sphi 0, %s313
      %s330 = sphi 0, %s314
    $region4: #{tpu_custom_call.1} parent=1 // loop_header_branch
      %25 = sbr.rel (%p23) target = $region8
    $region5: #{tpu_custom_call.1} parent=1 // loop_body
      %s27 = ssub.s32 %s22, 1
      %s28 = ssub.s32 %s22, 2
      %s29 = sadd.s32 %s22, 1
      %s30 = ssub.s32 %s22, %s29
      %p31 = scmp.eq.s32.totalorder %s30, 0
      %s33 = sadd.s32 %s32, 1
      %s34 = scalar_select %p31, %s32, %s33
      %p37 = pneg %p31
      %p38 = scmp.eq.s32.totalorder %s22, 1
      %p39 = por %p37, %p38
      %p40 = scmp.ne.s32.totalorder %s32, %s35
      %p41 = scmp.eq.s32.totalorder %s22, 0
      %p42 = por %p40, %p41
      %p43 = scmp.ne.s32.totalorder %s32, %s35
      %p44 = scmp.eq.s32.totalorder %s27, 1
      %p45 = por %p43, %p44
      %p46 = scmp.ne.s32.totalorder %s35, %s36
      %p47 = scmp.eq.s32.totalorder %s27, 0
      %p48 = por %p46, %p47
      %p49 = scmp.ne.s32.totalorder %s35, %s36
      %p50 = scmp.eq.s32.totalorder %s28, 1
      %p51 = por %p49, %p50
      %p53 = scmp.ne.s32.totalorder %s36, %s52
      %p54 = scmp.eq.s32.totalorder %s28, 0
      %p55 = por %p53, %p54
      %s57 = sadd.s32 %s56, 1
      %p60 = scmp.eq.s32.totalorder %s22, 1
      %p61 = scmp.ne.s32.totalorder %s56, %s58
      %p62 = scmp.eq.s32.totalorder %s22, 0
      %p63 = por %p61, %p62
      %p64 = scmp.ne.s32.totalorder %s56, %s58
      %p65 = scmp.eq.s32.totalorder %s27, 1
      %p66 = por %p64, %p65
      %p67 = scmp.ne.s32.totalorder %s58, %s59
      %p68 = scmp.eq.s32.totalorder %s27, 0
      %p69 = por %p67, %p68
      %p70 = scmp.ne.s32.totalorder %s58, %s59
      %p71 = scmp.eq.s32.totalorder %s28, 1
      %p72 = por %p70, %p71
      %p74 = scmp.ne.s32.totalorder %s59, %s73
      %p75 = scmp.eq.s32.totalorder %s28, 0
      %p76 = por %p74, %p75
      %s78 = sadd.s32 %s77, 1
      %p81 = scmp.eq.s32.totalorder %s22, 1
      %p82 = scmp.ne.s32.totalorder %s77, %s79
      %p83 = scmp.eq.s32.totalorder %s22, 0
      %p84 = por %p82, %p83
      %p85 = scmp.ne.s32.totalorder %s77, %s79
      %p86 = scmp.eq.s32.totalorder %s27, 1
      %p87 = por %p85, %p86
      %p88 = scmp.ne.s32.totalorder %s79, %s80
      %p89 = scmp.eq.s32.totalorder %s27, 0
      %p90 = por %p88, %p89
      %p91 = scmp.ne.s32.totalorder %s79, %s80
      %p92 = scmp.eq.s32.totalorder %s28, 1
      %p93 = por %p91, %p92
      %p95 = scmp.ne.s32.totalorder %s80, %s94
      %p96 = scmp.eq.s32.totalorder %s28, 0
      %p97 = por %p95, %p96
      %s99 = sadd.s32 %s98, 1
      %p102 = scmp.eq.s32.totalorder %s22, 1
      %p103 = scmp.ne.s32.totalorder %s98, %s100
      %p104 = scmp.eq.s32.totalorder %s22, 0
      %p105 = por %p103, %p104
      %p106 = scmp.ne.s32.totalorder %s98, %s100
      %p107 = scmp.eq.s32.totalorder %s27, 1
      %p108 = por %p106, %p107
      %p109 = scmp.ne.s32.totalorder %s100, %s101
      %p110 = scmp.eq.s32.totalorder %s27, 0
      %p111 = por %p109, %p110
      %p112 = scmp.ne.s32.totalorder %s100, %s101
      %p113 = scmp.eq.s32.totalorder %s28, 1
      %p114 = por %p112, %p113
      %p116 = scmp.ne.s32.totalorder %s101, %s115
      %p117 = scmp.eq.s32.totalorder %s28, 0
      %p118 = por %p116, %p117
      %s120 = sadd.s32 %s119, 1
      %p123 = scmp.eq.s32.totalorder %s22, 1
      %p124 = scmp.ne.s32.totalorder %s119, %s121
      %p125 = scmp.eq.s32.totalorder %s22, 0
      %p126 = por %p124, %p125
      %p127 = scmp.ne.s32.totalorder %s119, %s121
      %p128 = scmp.eq.s32.totalorder %s27, 1
      %p129 = por %p127, %p128
      %p130 = scmp.ne.s32.totalorder %s121, %s122
      %p131 = scmp.eq.s32.totalorder %s27, 0
      %p132 = por %p130, %p131
      %p133 = scmp.ne.s32.totalorder %s121, %s122
      %p134 = scmp.eq.s32.totalorder %s28, 1
      %p135 = por %p133, %p134
      %p137 = scmp.ne.s32.totalorder %s122, %s136
      %p138 = scmp.eq.s32.totalorder %s28, 0
      %p139 = por %p137, %p138
      %s141 = sadd.s32 %s140, 1
      %p144 = scmp.eq.s32.totalorder %s22, 1
      %p145 = scmp.ne.s32.totalorder %s140, %s142
      %p146 = scmp.eq.s32.totalorder %s22, 0
      %p147 = por %p145, %p146
      %p148 = scmp.ne.s32.totalorder %s140, %s142
      %p149 = scmp.eq.s32.totalorder %s27, 1
      %p150 = por %p148, %p149
      %p151 = scmp.ne.s32.totalorder %s142, %s143
      %p152 = scmp.eq.s32.totalorder %s27, 0
      %p153 = por %p151, %p152
      %p154 = scmp.ne.s32.totalorder %s142, %s143
      %p155 = scmp.eq.s32.totalorder %s28, 1
      %p156 = por %p154, %p155
      %p158 = scmp.ne.s32.totalorder %s143, %s157
      %p159 = scmp.eq.s32.totalorder %s28, 0
      %p160 = por %p158, %p159
      %s162 = sadd.s32 %s161, 1
      %p165 = scmp.eq.s32.totalorder %s22, 1
      %p166 = scmp.ne.s32.totalorder %s161, %s163
      %p167 = scmp.eq.s32.totalorder %s22, 0
      %p168 = por %p166, %p167
      %p169 = scmp.ne.s32.totalorder %s161, %s163
      %p170 = scmp.eq.s32.totalorder %s27, 1
      %p171 = por %p169, %p170
      %p172 = scmp.ne.s32.totalorder %s163, %s164
      %p173 = scmp.eq.s32.totalorder %s27, 0
      %p174 = por %p172, %p173
      %p175 = scmp.ne.s32.totalorder %s163, %s164
      %p176 = scmp.eq.s32.totalorder %s28, 1
      %p177 = por %p175, %p176
      %p179 = scmp.ne.s32.totalorder %s164, %s178
      %p180 = scmp.eq.s32.totalorder %s28, 0
      %p181 = por %p179, %p180
      %s183 = sadd.s32 %s182, 1
      %p186 = scmp.eq.s32.totalorder %s22, 1
      %p187 = scmp.ne.s32.totalorder %s182, %s184
      %p188 = scmp.eq.s32.totalorder %s22, 0
      %p189 = por %p187, %p188
      %p190 = scmp.ne.s32.totalorder %s182, %s184
      %p191 = scmp.eq.s32.totalorder %s27, 1
      %p192 = por %p190, %p191
      %p193 = scmp.ne.s32.totalorder %s184, %s185
      %p194 = scmp.eq.s32.totalorder %s27, 0
      %p195 = por %p193, %p194
      %p196 = scmp.ne.s32.totalorder %s184, %s185
      %p197 = scmp.eq.s32.totalorder %s28, 1
      %p198 = por %p196, %p197
      %p200 = scmp.ne.s32.totalorder %s185, %s199
      %p201 = scmp.eq.s32.totalorder %s28, 0
      %p202 = por %p200, %p201
      %s204 = sadd.s32 %s203, 1
      %p207 = scmp.eq.s32.totalorder %s22, 1
      %p208 = scmp.ne.s32.totalorder %s203, %s205
      %p209 = scmp.eq.s32.totalorder %s22, 0
      %p210 = por %p208, %p209
      %p211 = scmp.ne.s32.totalorder %s203, %s205
      %p212 = scmp.eq.s32.totalorder %s27, 1
      %p213 = por %p211, %p212
      %p214 = scmp.ne.s32.totalorder %s205, %s206
      %p215 = scmp.eq.s32.totalorder %s27, 0
      %p216 = por %p214, %p215
      %p217 = scmp.ne.s32.totalorder %s205, %s206
      %p218 = scmp.eq.s32.totalorder %s28, 1
      %p219 = por %p217, %p218
      %p221 = scmp.ne.s32.totalorder %s206, %s220
      %p222 = scmp.eq.s32.totalorder %s28, 0
      %p223 = por %p221, %p222
      %s225 = sadd.s32 %s224, 1
      %p228 = scmp.eq.s32.totalorder %s22, 1
      %p229 = scmp.ne.s32.totalorder %s224, %s226
      %p230 = scmp.eq.s32.totalorder %s22, 0
      %p231 = por %p229, %p230
      %p232 = scmp.ne.s32.totalorder %s224, %s226
      %p233 = scmp.eq.s32.totalorder %s27, 1
      %p234 = por %p232, %p233
      %p235 = scmp.ne.s32.totalorder %s226, %s227
      %p236 = scmp.eq.s32.totalorder %s27, 0
      %p237 = por %p235, %p236
      %p238 = scmp.ne.s32.totalorder %s226, %s227
      %p239 = scmp.eq.s32.totalorder %s28, 1
      %p240 = por %p238, %p239
      %p242 = scmp.ne.s32.totalorder %s227, %s241
      %p243 = scmp.eq.s32.totalorder %s28, 0
      %p244 = por %p242, %p243
      %s246 = sadd.s32 %s245, 1
      %p249 = scmp.eq.s32.totalorder %s22, 1
      %p250 = scmp.ne.s32.totalorder %s245, %s247
      %p251 = scmp.eq.s32.totalorder %s22, 0
      %p252 = por %p250, %p251
      %p253 = scmp.ne.s32.totalorder %s245, %s247
      %p254 = scmp.eq.s32.totalorder %s27, 1
      %p255 = por %p253, %p254
      %p256 = scmp.ne.s32.totalorder %s247, %s248
      %p257 = scmp.eq.s32.totalorder %s27, 0
      %p258 = por %p256, %p257
      %p259 = scmp.ne.s32.totalorder %s247, %s248
      %p260 = scmp.eq.s32.totalorder %s28, 1
      %p261 = por %p259, %p260
      %p263 = scmp.ne.s32.totalorder %s248, %s262
      %p264 = scmp.eq.s32.totalorder %s28, 0
      %p265 = por %p263, %p264
      %s267 = sadd.s32 %s266, 1
      %p270 = scmp.eq.s32.totalorder %s22, 1
      %p271 = scmp.ne.s32.totalorder %s266, %s268
      %p272 = scmp.eq.s32.totalorder %s22, 0
      %p273 = por %p271, %p272
      %p274 = scmp.ne.s32.totalorder %s266, %s268
      %p275 = scmp.eq.s32.totalorder %s27, 1
      %p276 = por %p274, %p275
      %p277 = scmp.ne.s32.totalorder %s268, %s269
      %p278 = scmp.eq.s32.totalorder %s27, 0
      %p279 = por %p277, %p278
      %p280 = scmp.ne.s32.totalorder %s268, %s269
      %p281 = scmp.eq.s32.totalorder %s28, 1
      %p282 = por %p280, %p281
      %p284 = scmp.ne.s32.totalorder %s269, %s283
      %p285 = scmp.eq.s32.totalorder %s28, 0
      %p286 = por %p284, %p285
      %s288 = sadd.s32 %s287, 1
      %p291 = scmp.eq.s32.totalorder %s22, 1
      %p292 = scmp.ne.s32.totalorder %s287, %s289
      %p293 = scmp.eq.s32.totalorder %s22, 0
      %p294 = por %p292, %p293
      %p295 = scmp.ne.s32.totalorder %s287, %s289
      %p296 = scmp.eq.s32.totalorder %s27, 1
      %p297 = por %p295, %p296
      %p298 = scmp.ne.s32.totalorder %s289, %s290
      %p299 = scmp.eq.s32.totalorder %s27, 0
      %p300 = por %p298, %p299
      %p301 = scmp.ne.s32.totalorder %s289, %s290
      %p302 = scmp.eq.s32.totalorder %s28, 1
      %p303 = por %p301, %p302
      %p305 = scmp.ne.s32.totalorder %s290, %s304
      %p306 = scmp.eq.s32.totalorder %s28, 0
      %p307 = por %p305, %p306
      %s308 = ssub.s32 %s22, %s29
      %p309 = scmp.eq.s32.totalorder %s308, 0
      %s311 = sadd.s32 %s310, 1
      %s312 = scalar_select %p309, %s310, %s311
      %p315 = pneg %p309
      %p316 = scmp.eq.s32.totalorder %s22, 1
      %p317 = por %p315, %p316
      %p318 = scmp.ne.s32.totalorder %s310, %s313
      %p319 = scmp.eq.s32.totalorder %s22, 0
      %p320 = por %p318, %p319
      %p321 = scmp.ne.s32.totalorder %s310, %s313
      %p322 = scmp.eq.s32.totalorder %s27, 1
      %p323 = por %p321, %p322
      %p324 = scmp.ne.s32.totalorder %s313, %s314
      %p325 = scmp.eq.s32.totalorder %s27, 0
      %p326 = por %p324, %p325
      %p327 = scmp.ne.s32.totalorder %s313, %s314
      %p328 = scmp.eq.s32.totalorder %s28, 1
      %p329 = por %p327, %p328
      %p331 = scmp.ne.s32.totalorder %s314, %s330
      %p332 = scmp.eq.s32.totalorder %s28, 0
      %p333 = por %p331, %p332
      %p334 = scmp.le.s32.totalorder 1, %s22
      %p335 = scmp.lt.s32.totalorder %s22, 3
      %p336 = pnand %p334, %p335
      %p337 = pneg %p336
      // Predicated region
      $region9: #{tpu_custom_call.1} parent=5 // pred_check
        _
      $region10: #{tpu_custom_call.1} parent=5 // pred_check_branch
        %339 = sbr.rel (%p336) target = $region12
      $region11: #{tpu_custom_call.1} parent=5 // pred_region
        %s340 = ssub.s32 %s22, 1
        // Predicated region
        $region13: #{tpu_custom_call.1} parent=11 // pred_check
          %p341 = pneg %p69
        $region14: #{tpu_custom_call.1} parent=11 // pred_check_branch
          %343 = sbr.rel (%p341) target = $region16
        $region15: #{tpu_custom_call.1} parent=11 // pred_region
          _
        $region16: #{tpu_custom_call.1} parent=11 // pred_fallthru
          _
        // Predicated region
        $region17: #{tpu_custom_call.1} parent=11 // pred_check
          %p344 = pneg %p90
        $region18: #{tpu_custom_call.1} parent=11 // pred_check_branch
          %346 = sbr.rel (%p344) target = $region20
        $region19: #{tpu_custom_call.1} parent=11 // pred_region
          _
        $region20: #{tpu_custom_call.1} parent=11 // pred_fallthru
          _
        // Predicated region
        $region21: #{tpu_custom_call.1} parent=11 // pred_check
          %p347 = pneg %p111
        $region22: #{tpu_custom_call.1} parent=11 // pred_check_branch
          %349 = sbr.rel (%p347) target = $region24
        $region23: #{tpu_custom_call.1} parent=11 // pred_region
          _
        $region24: #{tpu_custom_call.1} parent=11 // pred_fallthru
          _
        // Predicated region
        $region25: #{tpu_custom_call.1} parent=11 // pred_check
          %p350 = pneg %p132
        $region26: #{tpu_custom_call.1} parent=11 // pred_check_branch
          %352 = sbr.rel (%p350) target = $region28
        $region27: #{tpu_custom_call.1} parent=11 // pred_region
          _
        $region28: #{tpu_custom_call.1} parent=11 // pred_fallthru
          _
        // Predicated region
        $region29: #{tpu_custom_call.1} parent=11 // pred_check
          %p353 = pneg %p153
        $region30: #{tpu_custom_call.1} parent=11 // pred_check_branch
          %355 = sbr.rel (%p353) target = $region32
        $region31: #{tpu_custom_call.1} parent=11 // pred_region
          _
        $region32: #{tpu_custom_call.1} parent=11 // pred_fallthru
          _
        // Predicated region
        $region33: #{tpu_custom_call.1} parent=11 // pred_check
          %p356 = pneg %p174
        $region34: #{tpu_custom_call.1} parent=11 // pred_check_branch
          %358 = sbr.rel (%p356) target = $region36
        $region35: #{tpu_custom_call.1} parent=11 // pred_region
          _
        $region36: #{tpu_custom_call.1} parent=11 // pred_fallthru
          _
        // Predicated region
        $region37: #{tpu_custom_call.1} parent=11 // pred_check
          %p359 = pneg %p195
        $region38: #{tpu_custom_call.1} parent=11 // pred_check_branch
          %361 = sbr.rel (%p359) target = $region40
        $region39: #{tpu_custom_call.1} parent=11 // pred_region
          _
        $region40: #{tpu_custom_call.1} parent=11 // pred_fallthru
          _
        // Predicated region
        $region41: #{tpu_custom_call.1} parent=11 // pred_check
          %p362 = pneg %p216
        $region42: #{tpu_custom_call.1} parent=11 // pred_check_branch
          %364 = sbr.rel (%p362) target = $region44
        $region43: #{tpu_custom_call.1} parent=11 // pred_region
          _
        $region44: #{tpu_custom_call.1} parent=11 // pred_fallthru
          _
        // Predicated region
        $region45: #{tpu_custom_call.1} parent=11 // pred_check
          %p365 = pneg %p237
        $region46: #{tpu_custom_call.1} parent=11 // pred_check_branch
          %367 = sbr.rel (%p365) target = $region48
        $region47: #{tpu_custom_call.1} parent=11 // pred_region
          _
        $region48: #{tpu_custom_call.1} parent=11 // pred_fallthru
          _
        // Predicated region
        $region49: #{tpu_custom_call.1} parent=11 // pred_check
          %p368 = pneg %p258
        $region50: #{tpu_custom_call.1} parent=11 // pred_check_branch
          %370 = sbr.rel (%p368) target = $region52
        $region51: #{tpu_custom_call.1} parent=11 // pred_region
          _
        $region52: #{tpu_custom_call.1} parent=11 // pred_fallthru
          _
        // Predicated region
        $region53: #{tpu_custom_call.1} parent=11 // pred_check
          %p371 = pneg %p279
        $region54: #{tpu_custom_call.1} parent=11 // pred_check_branch
          %373 = sbr.rel (%p371) target = $region56
        $region55: #{tpu_custom_call.1} parent=11 // pred_region
          _
        $region56: #{tpu_custom_call.1} parent=11 // pred_fallthru
          _
        // Predicated region
        $region57: #{tpu_custom_call.1} parent=11 // pred_check
          %p374 = pneg %p300
        $region58: #{tpu_custom_call.1} parent=11 // pred_check_branch
          %376 = sbr.rel (%p374) target = $region60
        $region59: #{tpu_custom_call.1} parent=11 // pred_region
          _
        $region60: #{tpu_custom_call.1} parent=11 // pred_fallthru
          _
      $region12: #{tpu_custom_call.1} parent=5 // pred_fallthru
        _
      %p377 = scmp.lt.s32.totalorder %s22, 2
      // Predicated region
      $region61: #{tpu_custom_call.1} parent=5 // pred_check
        %p378 = pneg %p377
      $region62: #{tpu_custom_call.1} parent=5 // pred_check_branch
        %380 = sbr.rel (%p378) target = $region64
      $region63: #{tpu_custom_call.1} parent=5 // pred_region
        // Predicated region
        $region65: #{tpu_custom_call.1} parent=63 // pred_check
          %p381 = pneg %p42
        $region66: #{tpu_custom_call.1} parent=63 // pred_check_branch
          %383 = sbr.rel (%p381) target = $region68
        $region67: #{tpu_custom_call.1} parent=63 // pred_region
          %p384 = scmp.lt.s32.totalorder %s22, 1
          %s385 = scalar_select %p384, %s22, 1
          %s386 = smul.addr %s385, 2
          %s387 = smul.addr %s386, 8
          %s388 = scalar_lea.vmem %s0, %s387
        $region68: #{tpu_custom_call.1} parent=63 // pred_fallthru
          _
      $region64: #{tpu_custom_call.1} parent=5 // pred_fallthru
        _
      %p389 = scmp.le.s32.totalorder 1, %s22
      %p390 = scmp.lt.s32.totalorder %s22, 3
      %p391 = pnand %p389, %p390
      %p392 = pneg %p391
      // Predicated region
      $region69: #{tpu_custom_call.1} parent=5 // pred_check
        _
      $region70: #{tpu_custom_call.1} parent=5 // pred_check_branch
        %394 = sbr.rel (%p391) target = $region72
      $region71: #{tpu_custom_call.1} parent=5 // pred_region
        %s395 = ssub.s32 %s22, 1
        %p396 = scmp.lt.s32.totalorder %s27, 1
        %s397 = scalar_select %p396, %s27, 1
        %s398 = smul.addr %s397, 2
        %s399 = smul.addr %s398, 8
        %s400 = scalar_lea.vmem %s0, %s399
        %p401 = pneg %p48
        %p402 = pneg %p45
        %p403 = pneg %p69
        %p404 = pneg %p66
        %p405 = pneg %p90
        %p406 = pneg %p87
        %p407 = pneg %p111
        %p408 = pneg %p108
        %p409 = pneg %p132
        %p410 = pneg %p129
        %p411 = pneg %p153
        %p412 = pneg %p150
        %p413 = pneg %p174
        %p414 = pneg %p171
        %p415 = pneg %p195
        %p416 = pneg %p192
        %p417 = pneg %p216
        %p418 = pneg %p213
        %p419 = pneg %p237
        %p420 = pneg %p234
        %p421 = pneg %p258
        %p422 = pneg %p255
        %p423 = pneg %p279
        %p424 = pneg %p276
        %p425 = pneg %p300
        %p426 = pneg %p297
        %p427 = pneg %p326
        %p428 = pneg %p323
        %s429 = sand.u32 %s313, 1
        %s430 = scalar_lea.sflag [#allocation4], %s429
        %s431 = sand.u32 %s313, 1
        %s432 = smul.addr %s431, 16
        %s433 = scalar_lea.vmem [#allocation3], %s432
        %p434 = scmp.lt.s32.totalorder %s27, 1
        %s435 = scalar_select %p434, %s27, 1
        %s436 = smul.addr %s435, 2
        %s437 = smul.addr %s436, 8
        %s438 = scalar_lea.vmem %s0, %s437
        %v440 = vld [vmem:[%s438] sm:$0xff]
        %v441 = vld [vmem:[%s438 + $0x8] sm:$0xff]
        %v442 = vld [vmem:[%s1] sm:$0x1]
        %v443 = vld [vmem:[%s2] sm:$0x1]
        %vm444 = vcmask 261120
        %v445 = vsel %vm444, %v440, 0.0
        %446 = vadd.xlane.f32.xlu0 %v445
        %v447 = vpop.xlane.xlu0 %446
        %v448 = vsel %vm444, %v441, 0.0
        %449 = vadd.xlane.f32.xlu0 %v448
        %v450 = vpop.xlane.xlu0 %449
        %v451 = vrcp.pop 32.0
        %v452 = vmul.f32 %v447, %v451
        %v453 = vmul.f32 %v450, %v451
        %v454 = vsub.f32 %v440, %v452
        %v455 = vsub.f32 %v441, %v453
        %v456 = vmul.f32 %v454, %v454
        %v457 = vmul.f32 %v455, %v455
        %v458 = vsel %vm444, %v456, 0.0
        %459 = vadd.xlane.f32.xlu0 %v458
        %v460 = vpop.xlane.xlu0 %459
        %v461 = vsel %vm444, %v457, 0.0
        %462 = vadd.xlane.f32.xlu0 %v461
        %v463 = vpop.xlane.xlu0 %462
        %v464 = vmul.f32 %v460, %v451
        %v465 = vmul.f32 %v463, %v451
        %v466 = vadd.f32 %v464, 1e-05
        %v467 = vadd.f32 %v465, 1e-05
        %v468 = vrsqrt.pop %v466
        %v469 = vrsqrt.pop %v467
        %v470 = vmul.f32 %v454, %v468
        %v471 = vmul.f32 %v455, %v469
        %v473 = vlaneseq
        %v474 = vshrl.u32 %v473, 7
        %v475 = vsub.s32 0, %v474
        %v476 = vrot.slane %v442, %v475
        %v478 = vmul.f32 %v470, %v476
        %v479 = vmul.f32 %v471, %v476
        %v481 = vlaneseq
        %v482 = vshrl.u32 %v481, 7
        %v483 = vsub.s32 0, %v482
        %v484 = vrot.slane %v443, %v483
        %v486 = vadd.f32 %v478, %v484
        %v487 = vadd.f32 %v479, %v484
        %v488 = vpack.c.bf16 %v487, %v486
        %v489 = vld [vmem:[%s3] sm:$0xf]
        %v490 = vld [vmem:[%s3 + $0x4] sm:$0xf]
        %v491 = vld [vmem:[%s3 + $0x8] sm:$0xf]
        %v492 = vld [vmem:[%s3 + $0xc] sm:$0xf]
        %v493 = vld [vmem:[%s4] sm:$0x1]
        %v495 = vlaneseq
        %v496 = vshrl.u32 %v495, 7
        %v497 = vsub.s32 0, %v496
        %v498 = vrot.slane %v493, %v497
        %v504 = vunpack.c.l.b16 %v489
        %v505 = vunpack.c.l.b16 %v490
        %v506 = vunpack.c.l.b16 %v491
        %v507 = vunpack.c.l.b16 %v492
        %v508 = vpack.c.b16 %v505, %v504
        %v509 = vpack.c.b16 %v507, %v506
        %v513 = vsel %vm444, %v488, 0
        %515 = vmatprep.subr.bf16.mxu0 0
        %516 = vmatpush1.bf16.msra.mxu0 %v508
        %517 = vmatprep.subr.bf16.mxu0 0
        %518 = vmatpush1.bf16.msra.mxu0 %v509
        %519 = vmatprep.subr.bf16.mxu0 0
        %520 = vmatpush1.bf16.msra.mxu0 0
        %521 = vmatprep.subr.bf16.mxu0 0
        %522 = vmatpush1.bf16.msra.mxu0 0
        %523 = vmatprep.subr.bf16.mxu0 0
        %524 = vmatpush1.bf16.msra.mxu0 0
        %525 = vmatprep.subr.bf16.mxu0 0
        %526 = vmatpush1.bf16.msra.mxu0 0
        %527 = vmatprep.subr.bf16.mxu0 0
        %528 = vmatpush1.bf16.msra.mxu0 0
        %529 = vmatprep.subr.bf16.mxu0 0
        %530 = vmatpush1.bf16.msra.mxu0 0
        %531 = vmatprep.subr.bf16.mxu0 0
        %532 = vmatpush1.bf16.msra.mxu0 0
        %533 = vmatprep.subr.bf16.mxu0 0
        %534 = vmatpush1.bf16.msra.mxu0 0
        %535 = vmatprep.subr.bf16.mxu0 0
        %536 = vmatpush1.bf16.msra.mxu0 0
        %537 = vmatprep.subr.bf16.mxu0 0
        %538 = vmatpush1.bf16.msra.mxu0 0
        %539 = vmatprep.subr.bf16.mxu0 0
        %540 = vmatpush1.bf16.msra.mxu0 0
        %541 = vmatprep.subr.bf16.mxu0 0
        %542 = vmatpush1.bf16.msra.mxu0 0
        %543 = vmatprep.subr.bf16.mxu0 0
        %544 = vmatpush1.bf16.msra.mxu0 0
        %545 = vmatprep.subr.bf16.mxu0 0
        %546 = vmatpush1.bf16.msra.mxu0 0
        %547 = vmatprep.mubr.bf16.mxu0 0
        %548 = vmatmul.mubr.bf16.gmra.mrb[0].mxu0 %v513
        %v549 = vpop.f32.mrb[0].mxu0
        %v550 = vadd.f32 %v498, %v549
        %v551 = vpop.f32.mrb[0].mxu0
        %v552 = vpop.f32.mrb[0].mxu0
        %v553 = vadd.f32 %v498, %v552
        %v554 = vpop.f32.mrb[0].mxu0
        %555 = vdwg.mxu0
        %558 = vrot.lane.b32.xlu0 %v550, 120
        %v559 = vpop.permute.xlu0 %558
        %560 = vrot.lane.b32.xlu0 %v553, 120
        %v561 = vpop.permute.xlu0 %560
        %564 = vrot.lane.b32.xlu0 %v550, 112
        %v565 = vpop.permute.xlu0 %564
        %566 = vrot.lane.b32.xlu0 %v553, 112
        %v567 = vpop.permute.xlu0 %566
        %570 = vrot.lane.b32.xlu0 %v550, 104
        %v571 = vpop.permute.xlu0 %570
        %572 = vrot.lane.b32.xlu0 %v553, 104
        %v573 = vpop.permute.xlu0 %572
        %v576 = vpack.c.bf16 %v553, %v550
        %v577 = vpack.c.bf16 %v561, %v559
        %v578 = vpack.c.bf16 %v567, %v565
        %v579 = vpack.c.bf16 %v573, %v571
        %581 = vrot.lane.b32.xlu0 %v576, 96
        %v582 = vpop.permute.xlu0 %581
        %vm583 = vcmask 64512
        %v585 = vsel %vm583, %v576, 0
        %v588 = vsel %vm583, %v582, 0
        %590 = vmatprep.subr.bf16.mxu0 0
        %591 = vmatpush1.bf16.xpose.msra.mxu0 %v588
        %592 = vmatprep.subr.bf16.mxu0 0
        %593 = vmatpush1.bf16.xpose.msra.mxu0 0
        %594 = vmatprep.subr.bf16.mxu0 0
        %595 = vmatpush1.bf16.xpose.msra.mxu0 0
        %596 = vmatprep.subr.bf16.mxu0 0
        %597 = vmatpush1.bf16.xpose.msra.mxu0 0
        %598 = vmatprep.subr.bf16.mxu0 0
        %599 = vmatpush1.bf16.xpose.msra.mxu0 0
        %600 = vmatprep.subr.bf16.mxu0 0
        %601 = vmatpush1.bf16.xpose.msra.mxu0 0
        %602 = vmatprep.subr.bf16.mxu0 0
        %603 = vmatpush1.bf16.xpose.msra.mxu0 0
        %604 = vmatprep.subr.bf16.mxu0 0
        %605 = vmatpush1.bf16.xpose.msra.mxu0 0
        %606 = vmatprep.subr.bf16.mxu0 0
        %607 = vmatpush1.bf16.xpose.msra.mxu0 0
        %608 = vmatprep.subr.bf16.mxu0 0
        %609 = vmatpush1.bf16.xpose.msra.mxu0 0
        %610 = vmatprep.subr.bf16.mxu0 0
        %611 = vmatpush1.bf16.xpose.msra.mxu0 0
        %612 = vmatprep.subr.bf16.mxu0 0
        %613 = vmatpush1.bf16.xpose.msra.mxu0 0
        %614 = vmatprep.subr.bf16.mxu0 0
        %615 = vmatpush1.bf16.xpose.msra.mxu0 0
        %616 = vmatprep.subr.bf16.mxu0 0
        %617 = vmatpush1.bf16.xpose.msra.mxu0 0
        %618 = vmatprep.subr.bf16.mxu0 0
        %619 = vmatpush1.bf16.xpose.msra.mxu0 0
        %620 = vmatprep.subr.bf16.mxu0 0
        %621 = vmatpush1.bf16.xpose.msra.mxu0 0
        %622 = vmatprep.mubr.bf16.mxu0 0
        %623 = vmatmul.mubr.bf16.gmra.mrb[0].mxu0 %v585
        %v624 = vpop.f32.mrb[0].mxu0
        %v625 = vadd.f32 0.0, %v624
        %v626 = vpop.f32.mrb[0].mxu0
        %v627 = vpop.f32.mrb[0].mxu0
        %v628 = vadd.f32 0.0, %v627
        %v629 = vpop.f32.mrb[0].mxu0
        %630 = vdwg.mxu0
        %632 = vrot.lane.b32.xlu0 %v577, 96
        %v633 = vpop.permute.xlu0 %632
        %v635 = vsel %vm583, %v577, 0
        %v638 = vsel %vm583, %v633, 0
        %640 = vmatprep.subr.bf16.mxu0 0
        %641 = vmatpush1.bf16.xpose.msra.mxu0 %v638
        %642 = vmatprep.subr.bf16.mxu0 0
        %643 = vmatpush1.bf16.xpose.msra.mxu0 0
        %644 = vmatprep.subr.bf16.mxu0 0
        %645 = vmatpush1.bf16.xpose.msra.mxu0 0
        %646 = vmatprep.subr.bf16.mxu0 0
        %647 = vmatpush1.bf16.xpose.msra.mxu0 0
        %648 = vmatprep.subr.bf16.mxu0 0
        %649 = vmatpush1.bf16.xpose.msra.mxu0 0
        %650 = vmatprep.subr.bf16.mxu0 0
        %651 = vmatpush1.bf16.xpose.msra.mxu0 0
        %652 = vmatprep.subr.bf16.mxu0 0
        %653 = vmatpush1.bf16.xpose.msra.mxu0 0
        %654 = vmatprep.subr.bf16.mxu0 0
        %655 = vmatpush1.bf16.xpose.msra.mxu0 0
        %656 = vmatprep.subr.bf16.mxu0 0
        %657 = vmatpush1.bf16.xpose.msra.mxu0 0
        %658 = vmatprep.subr.bf16.mxu0 0
        %659 = vmatpush1.bf16.xpose.msra.mxu0 0
        %660 = vmatprep.subr.bf16.mxu0 0
        %661 = vmatpush1.bf16.xpose.msra.mxu0 0
        %662 = vmatprep.subr.bf16.mxu0 0
        %663 = vmatpush1.bf16.xpose.msra.mxu0 0
        %664 = vmatprep.subr.bf16.mxu0 0
        %665 = vmatpush1.bf16.xpose.msra.mxu0 0
        %666 = vmatprep.subr.bf16.mxu0 0
        %667 = vmatpush1.bf16.xpose.msra.mxu0 0
        %668 = vmatprep.subr.bf16.mxu0 0
        %669 = vmatpush1.bf16.xpose.msra.mxu0 0
        %670 = vmatprep.subr.bf16.mxu0 0
        %671 = vmatpush1.bf16.xpose.msra.mxu0 0
        %672 = vmatprep.mubr.bf16.mxu0 0
        %673 = vmatmul.mubr.bf16.gmra.mrb[0].mxu0 %v635
        %v674 = vpop.f32.mrb[0].mxu0
        %v675 = vadd.f32 0.0, %v674
        %v676 = vpop.f32.mrb[0].mxu0
        %v677 = vpop.f32.mrb[0].mxu0
        %v678 = vadd.f32 0.0, %v677
        %v679 = vpop.f32.mrb[0].mxu0
        %680 = vdwg.mxu0
        %682 = vrot.lane.b32.xlu0 %v578, 96
        %v683 = vpop.permute.xlu0 %682
        %v685 = vsel %vm583, %v578, 0
        %v688 = vsel %vm583, %v683, 0
        %690 = vmatprep.subr.bf16.mxu0 0
        %691 = vmatpush1.bf16.xpose.msra.mxu0 %v688
        %692 = vmatprep.subr.bf16.mxu0 0
        %693 = vmatpush1.bf16.xpose.msra.mxu0 0
        %694 = vmatprep.subr.bf16.mxu0 0
        %695 = vmatpush1.bf16.xpose.msra.mxu0 0
        %696 = vmatprep.subr.bf16.mxu0 0
        %697 = vmatpush1.bf16.xpose.msra.mxu0 0
        %698 = vmatprep.subr.bf16.mxu0 0
        %699 = vmatpush1.bf16.xpose.msra.mxu0 0
        %700 = vmatprep.subr.bf16.mxu0 0
        %701 = vmatpush1.bf16.xpose.msra.mxu0 0
        %702 = vmatprep.subr.bf16.mxu0 0
        %703 = vmatpush1.bf16.xpose.msra.mxu0 0
        %704 = vmatprep.subr.bf16.mxu0 0
        %705 = vmatpush1.bf16.xpose.msra.mxu0 0
        %706 = vmatprep.subr.bf16.mxu0 0
        %707 = vmatpush1.bf16.xpose.msra.mxu0 0
        %708 = vmatprep.subr.bf16.mxu0 0
        %709 = vmatpush1.bf16.xpose.msra.mxu0 0
        %710 = vmatprep.subr.bf16.mxu0 0
        %711 = vmatpush1.bf16.xpose.msra.mxu0 0
        %712 = vmatprep.subr.bf16.mxu0 0
        %713 = vmatpush1.bf16.xpose.msra.mxu0 0
        %714 = vmatprep.subr.bf16.mxu0 0
        %715 = vmatpush1.bf16.xpose.msra.mxu0 0
        %716 = vmatprep.subr.bf16.mxu0 0
        %717 = vmatpush1.bf16.xpose.msra.mxu0 0
        %718 = vmatprep.subr.bf16.mxu0 0
        %719 = vmatpush1.bf16.xpose.msra.mxu0 0
        %720 = vmatprep.subr.bf16.mxu0 0
        %721 = vmatpush1.bf16.xpose.msra.mxu0 0
        %722 = vmatprep.mubr.bf16.mxu0 0
        %723 = vmatmul.mubr.bf16.gmra.mrb[0].mxu0 %v685
        %v724 = vpop.f32.mrb[0].mxu0
        %v725 = vadd.f32 0.0, %v724
        %v726 = vpop.f32.mrb[0].mxu0
        %v727 = vpop.f32.mrb[0].mxu0
        %v728 = vadd.f32 0.0, %v727
        %v729 = vpop.f32.mrb[0].mxu0
        %730 = vdwg.mxu0
        %732 = vrot.lane.b32.xlu0 %v579, 96
        %v733 = vpop.permute.xlu0 %732
        %v735 = vsel %vm583, %v579, 0
        %v738 = vsel %vm583, %v733, 0
        %740 = vmatprep.subr.bf16.mxu0 0
        %741 = vmatpush1.bf16.xpose.msra.mxu0 %v738
        %742 = vmatprep.subr.bf16.mxu0 0
        %743 = vmatpush1.bf16.xpose.msra.mxu0 0
        %744 = vmatprep.subr.bf16.mxu0 0
        %745 = vmatpush1.bf16.xpose.msra.mxu0 0
        %746 = vmatprep.subr.bf16.mxu0 0
        %747 = vmatpush1.bf16.xpose.msra.mxu0 0
        %748 = vmatprep.subr.bf16.mxu0 0
        %749 = vmatpush1.bf16.xpose.msra.mxu0 0
        %750 = vmatprep.subr.bf16.mxu0 0
        %751 = vmatpush1.bf16.xpose.msra.mxu0 0
        %752 = vmatprep.subr.bf16.mxu0 0
        %753 = vmatpush1.bf16.xpose.msra.mxu0 0
        %754 = vmatprep.subr.bf16.mxu0 0
        %755 = vmatpush1.bf16.xpose.msra.mxu0 0
        %756 = vmatprep.subr.bf16.mxu0 0
        %757 = vmatpush1.bf16.xpose.msra.mxu0 0
        %758 = vmatprep.subr.bf16.mxu0 0
        %759 = vmatpush1.bf16.xpose.msra.mxu0 0
        %760 = vmatprep.subr.bf16.mxu0 0
        %761 = vmatpush1.bf16.xpose.msra.mxu0 0
        %762 = vmatprep.subr.bf16.mxu0 0
        %763 = vmatpush1.bf16.xpose.msra.mxu0 0
        %764 = vmatprep.subr.bf16.mxu0 0
        %765 = vmatpush1.bf16.xpose.msra.mxu0 0
        %766 = vmatprep.subr.bf16.mxu0 0
        %767 = vmatpush1.bf16.xpose.msra.mxu0 0
        %768 = vmatprep.subr.bf16.mxu0 0
        %769 = vmatpush1.bf16.xpose.msra.mxu0 0
        %770 = vmatprep.subr.bf16.mxu0 0
        %771 = vmatpush1.bf16.xpose.msra.mxu0 0
        %772 = vmatprep.mubr.bf16.mxu0 0
        %773 = vmatmul.mubr.bf16.gmra.mrb[0].mxu0 %v735
        %v774 = vpop.f32.mrb[0].mxu0
        %v775 = vadd.f32 0.0, %v774
        %v776 = vpop.f32.mrb[0].mxu0
        %v777 = vpop.f32.mrb[0].mxu0
        %v778 = vadd.f32 0.0, %v777
        %v779 = vpop.f32.mrb[0].mxu0
        %780 = vdwg.mxu0
        %vm781 = vcmask 130048
        %v782 = vsel %vm781, %v625, -inf
        %783 = vmax.xlane.f32.xlu0 %v782
        %v784 = vpop.xlane.xlu0 %783
        %v785 = vsel %vm781, %v628, -inf
        %786 = vmax.xlane.f32.xlu0 %v785
        %v787 = vpop.xlane.xlu0 %786
        %v788 = vsel %vm781, %v675, -inf
        %789 = vmax.xlane.f32.xlu0 %v788
        %v790 = vpop.xlane.xlu0 %789
        %v791 = vsel %vm781, %v678, -inf
        %792 = vmax.xlane.f32.xlu0 %v791
        %v793 = vpop.xlane.xlu0 %792
        %v794 = vsel %vm781, %v725, -inf
        %795 = vmax.xlane.f32.xlu0 %v794
        %v796 = vpop.xlane.xlu0 %795
        %v797 = vsel %vm781, %v728, -inf
        %798 = vmax.xlane.f32.xlu0 %v797
        %v799 = vpop.xlane.xlu0 %798
        %v800 = vsel %vm781, %v775, -inf
        %801 = vmax.xlane.f32.xlu0 %v800
        %v802 = vpop.xlane.xlu0 %801
        %v803 = vsel %vm781, %v778, -inf
        %804 = vmax.xlane.f32.xlu0 %v803
        %v805 = vpop.xlane.xlu0 %804
        %v806 = vsub.f32 %v625, %v784
        %v807 = vsub.f32 %v628, %v787
        %v808 = vsub.f32 %v675, %v790
        %v809 = vsub.f32 %v678, %v793
        %v810 = vsub.f32 %v725, %v796
        %v811 = vsub.f32 %v728, %v799
        %v812 = vsub.f32 %v775, %v802
        %v813 = vsub.f32 %v778, %v805
        %v814 = vmul.f32 %v806, 1.442695
        %v815 = vpow.pop %v814
        %v816 = vmul.f32 %v807, 1.442695
        %v817 = vpow.pop %v816
        %v818 = vmul.f32 %v808, 1.442695
        %v819 = vpow.pop %v818
        %v820 = vmul.f32 %v809, 1.442695
        %v821 = vpow.pop %v820
        %v822 = vmul.f32 %v810, 1.442695
        %v823 = vpow.pop %v822
        %v824 = vmul.f32 %v811, 1.442695
        %v825 = vpow.pop %v824
        %v826 = vmul.f32 %v812, 1.442695
        %v827 = vpow.pop %v826
        %v828 = vmul.f32 %v813, 1.442695
        %v829 = vpow.pop %v828
        %v830 = vsel %vm781, %v815, 0.0
        %831 = vadd.xlane.f32.xlu0 %v830
        %v832 = vpop.xlane.xlu0 %831
        %v833 = vsel %vm781, %v817, 0.0
        %834 = vadd.xlane.f32.xlu0 %v833
        %v835 = vpop.xlane.xlu0 %834
        %v836 = vsel %vm781, %v819, 0.0
        %837 = vadd.xlane.f32.xlu0 %v836
        %v838 = vpop.xlane.xlu0 %837
        %v839 = vsel %vm781, %v821, 0.0
        %840 = vadd.xlane.f32.xlu0 %v839
        %v841 = vpop.xlane.xlu0 %840
        %v842 = vsel %vm781, %v823, 0.0
        %843 = vadd.xlane.f32.xlu0 %v842
        %v844 = vpop.xlane.xlu0 %843
        %v845 = vsel %vm781, %v825, 0.0
        %846 = vadd.xlane.f32.xlu0 %v845
        %v847 = vpop.xlane.xlu0 %846
        %v848 = vsel %vm781, %v827, 0.0
        %849 = vadd.xlane.f32.xlu0 %v848
        %v850 = vpop.xlane.xlu0 %849
        %v851 = vsel %vm781, %v829, 0.0
        %852 = vadd.xlane.f32.xlu0 %v851
        %v853 = vpop.xlane.xlu0 %852
        %v854 = vrcp.pop %v832
        %v855 = vrcp.pop %v835
        %v856 = vrcp.pop %v838
        %v857 = vrcp.pop %v841
        %v858 = vrcp.pop %v844
        %v859 = vrcp.pop %v847
        %v860 = vrcp.pop %v850
        %v861 = vrcp.pop %v853
        %v862 = vmul.f32 %v815, %v854
        %v863 = vmul.f32 %v817, %v855
        %v864 = vmul.f32 %v819, %v856
        %v865 = vmul.f32 %v821, %v857
        %v866 = vmul.f32 %v823, %v858
        %v867 = vmul.f32 %v825, %v859
        %v868 = vmul.f32 %v827, %v860
        %v869 = vmul.f32 %v829, %v861
        %v870 = vpack.c.bf16 %v863, %v862
        %v871 = vpack.c.bf16 %v865, %v864
        %v872 = vpack.c.bf16 %v867, %v866
        %v873 = vpack.c.bf16 %v869, %v868
        %874 = vrot.lane.b32.xlu0 %v576, 64
        %v875 = vpop.permute.xlu0 %874
        %v878 = vsel %vm781, %v870, 0
        %880 = vmatprep.subr.bf16.mxu0 0
        %881 = vmatpush1.bf16.msra.mxu0 %v875
        %882 = vmatprep.subr.bf16.mxu0 0
        %883 = vmatpush1.bf16.msra.mxu0 0
        %884 = vmatprep.subr.bf16.mxu0 0
        %885 = vmatpush1.bf16.msra.mxu0 0
        %886 = vmatprep.subr.bf16.mxu0 0
        %887 = vmatpush1.bf16.msra.mxu0 0
        %888 = vmatprep.subr.bf16.mxu0 0
        %889 = vmatpush1.bf16.msra.mxu0 0
        %890 = vmatprep.subr.bf16.mxu0 0
        %891 = vmatpush1.bf16.msra.mxu0 0
        %892 = vmatprep.subr.bf16.mxu0 0
        %893 = vmatpush1.bf16.msra.mxu0 0
        %894 = vmatprep.subr.bf16.mxu0 0
        %895 = vmatpush1.bf16.msra.mxu0 0
        %896 = vmatprep.subr.bf16.mxu0 0
        %897 = vmatpush1.bf16.msra.mxu0 0
        %898 = vmatprep.subr.bf16.mxu0 0
        %899 = vmatpush1.bf16.msra.mxu0 0
        %900 = vmatprep.subr.bf16.mxu0 0
        %901 = vmatpush1.bf16.msra.mxu0 0
        %902 = vmatprep.subr.bf16.mxu0 0
        %903 = vmatpush1.bf16.msra.mxu0 0
        %904 = vmatprep.subr.bf16.mxu0 0
        %905 = vmatpush1.bf16.msra.mxu0 0
        %906 = vmatprep.subr.bf16.mxu0 0
        %907 = vmatpush1.bf16.msra.mxu0 0
        %908 = vmatprep.subr.bf16.mxu0 0
        %909 = vmatpush1.bf16.msra.mxu0 0
        %910 = vmatprep.subr.bf16.mxu0 0
        %911 = vmatpush1.bf16.msra.mxu0 0
        %912 = vmatprep.mubr.bf16.mxu0 0
        %913 = vmatmul.mubr.bf16.gmra.mrb[0].mxu0 %v878
        %v914 = vpop.f32.mrb[0].mxu0
        %v915 = vadd.f32 0.0, %v914
        %v916 = vpop.f32.mrb[0].mxu0
        %v917 = vpop.f32.mrb[0].mxu0
        %v918 = vadd.f32 0.0, %v917
        %v919 = vpop.f32.mrb[0].mxu0
        %920 = vdwg.mxu0
        %921 = vrot.lane.b32.xlu0 %v577, 64
        %v922 = vpop.permute.xlu0 %921
        %v925 = vsel %vm781, %v871, 0
        %927 = vmatprep.subr.bf16.mxu0 0
        %928 = vmatpush1.bf16.msra.mxu0 %v922
        %929 = vmatprep.subr.bf16.mxu0 0
        %930 = vmatpush1.bf16.msra.mxu0 0
        %931 = vmatprep.subr.bf16.mxu0 0
        %932 = vmatpush1.bf16.msra.mxu0 0
        %933 = vmatprep.subr.bf16.mxu0 0
        %934 = vmatpush1.bf16.msra.mxu0 0
        %935 = vmatprep.subr.bf16.mxu0 0
        %936 = vmatpush1.bf16.msra.mxu0 0
        %937 = vmatprep.subr.bf16.mxu0 0
        %938 = vmatpush1.bf16.msra.mxu0 0
        %939 = vmatprep.subr.bf16.mxu0 0
        %940 = vmatpush1.bf16.msra.mxu0 0
        %941 = vmatprep.subr.bf16.mxu0 0
        %942 = vmatpush1.bf16.msra.mxu0 0
        %943 = vmatprep.subr.bf16.mxu0 0
        %944 = vmatpush1.bf16.msra.mxu0 0
        %945 = vmatprep.subr.bf16.mxu0 0
        %946 = vmatpush1.bf16.msra.mxu0 0
        %947 = vmatprep.subr.bf16.mxu0 0
        %948 = vmatpush1.bf16.msra.mxu0 0
        %949 = vmatprep.subr.bf16.mxu0 0
        %950 = vmatpush1.bf16.msra.mxu0 0
        %951 = vmatprep.subr.bf16.mxu0 0
        %952 = vmatpush1.bf16.msra.mxu0 0
        %953 = vmatprep.subr.bf16.mxu0 0
        %954 = vmatpush1.bf16.msra.mxu0 0
        %955 = vmatprep.subr.bf16.mxu0 0
        %956 = vmatpush1.bf16.msra.mxu0 0
        %957 = vmatprep.subr.bf16.mxu0 0
        %958 = vmatpush1.bf16.msra.mxu0 0
        %959 = vmatprep.mubr.bf16.mxu0 0
        %960 = vmatmul.mubr.bf16.gmra.mrb[0].mxu0 %v925
        %v961 = vpop.f32.mrb[0].mxu0
        %v962 = vadd.f32 0.0, %v961
        %v963 = vpop.f32.mrb[0].mxu0
        %v964 = vpop.f32.mrb[0].mxu0
        %v965 = vadd.f32 0.0, %v964
        %v966 = vpop.f32.mrb[0].mxu0
        %967 = vdwg.mxu0
        %968 = vrot.lane.b32.xlu0 %v578, 64
        %v969 = vpop.permute.xlu0 %968
        %v972 = vsel %vm781, %v872, 0
        %974 = vmatprep.subr.bf16.mxu0 0
        %975 = vmatpush1.bf16.msra.mxu0 %v969
        %976 = vmatprep.subr.bf16.mxu0 0
        %977 = vmatpush1.bf16.msra.mxu0 0
        %978 = vmatprep.subr.bf16.mxu0 0
        %979 = vmatpush1.bf16.msra.mxu0 0
        %980 = vmatprep.subr.bf16.mxu0 0
        %981 = vmatpush1.bf16.msra.mxu0 0
        %982 = vmatprep.subr.bf16.mxu0 0
        %983 = vmatpush1.bf16.msra.mxu0 0
        %984 = vmatprep.subr.bf16.mxu0 0
        %985 = vmatpush1.bf16.msra.mxu0 0
        %986 = vmatprep.subr.bf16.mxu0 0
        %987 = vmatpush1.bf16.msra.mxu0 0
        %988 = vmatprep.subr.bf16.mxu0 0
        %989 = vmatpush1.bf16.msra.mxu0 0
        %990 = vmatprep.subr.bf16.mxu0 0
        %991 = vmatpush1.bf16.msra.mxu0 0
        %992 = vmatprep.subr.bf16.mxu0 0
        %993 = vmatpush1.bf16.msra.mxu0 0
        %994 = vmatprep.subr.bf16.mxu0 0
        %995 = vmatpush1.bf16.msra.mxu0 0
        %996 = vmatprep.subr.bf16.mxu0 0
        %997 = vmatpush1.bf16.msra.mxu0 0
        %998 = vmatprep.subr.bf16.mxu0 0
        %999 = vmatpush1.bf16.msra.mxu0 0
        %1000 = vmatprep.subr.bf16.mxu0 0
        %1001 = vmatpush1.bf16.msra.mxu0 0
        %1002 = vmatprep.subr.bf16.mxu0 0
        %1003 = vmatpush1.bf16.msra.mxu0 0
        %1004 = vmatprep.subr.bf16.mxu0 0
        %1005 = vmatpush1.bf16.msra.mxu0 0
        %1006 = vmatprep.mubr.bf16.mxu0 0
        %1007 = vmatmul.mubr.bf16.gmra.mrb[0].mxu0 %v972
        %v1008 = vpop.f32.mrb[0].mxu0
        %v1009 = vadd.f32 0.0, %v1008
        %v1010 = vpop.f32.mrb[0].mxu0
        %v1011 = vpop.f32.mrb[0].mxu0
        %v1012 = vadd.f32 0.0, %v1011
        %v1013 = vpop.f32.mrb[0].mxu0
        %1014 = vdwg.mxu0
        %1015 = vrot.lane.b32.xlu0 %v579, 64
        %v1016 = vpop.permute.xlu0 %1015
        %v1019 = vsel %vm781, %v873, 0
        %1021 = vmatprep.subr.bf16.mxu0 0
        %1022 = vmatpush1.bf16.msra.mxu0 %v1016
        %1023 = vmatprep.subr.bf16.mxu0 0
        %1024 = vmatpush1.bf16.msra.mxu0 0
        %1025 = vmatprep.subr.bf16.mxu0 0
        %1026 = vmatpush1.bf16.msra.mxu0 0
        %1027 = vmatprep.subr.bf16.mxu0 0
        %1028 = vmatpush1.bf16.msra.mxu0 0
        %1029 = vmatprep.subr.bf16.mxu0 0
        %1030 = vmatpush1.bf16.msra.mxu0 0
        %1031 = vmatprep.subr.bf16.mxu0 0
        %1032 = vmatpush1.bf16.msra.mxu0 0
        %1033 = vmatprep.subr.bf16.mxu0 0
        %1034 = vmatpush1.bf16.msra.mxu0 0
        %1035 = vmatprep.subr.bf16.mxu0 0
        %1036 = vmatpush1.bf16.msra.mxu0 0
        %1037 = vmatprep.subr.bf16.mxu0 0
        %1038 = vmatpush1.bf16.msra.mxu0 0
        %1039 = vmatprep.subr.bf16.mxu0 0
        %1040 = vmatpush1.bf16.msra.mxu0 0
        %1041 = vmatprep.subr.bf16.mxu0 0
        %1042 = vmatpush1.bf16.msra.mxu0 0
        %1043 = vmatprep.subr.bf16.mxu0 0
        %1044 = vmatpush1.bf16.msra.mxu0 0
        %1045 = vmatprep.subr.bf16.mxu0 0
        %1046 = vmatpush1.bf16.msra.mxu0 0
        %1047 = vmatprep.subr.bf16.mxu0 0
        %1048 = vmatpush1.bf16.msra.mxu0 0
        %1049 = vmatprep.subr.bf16.mxu0 0
        %1050 = vmatpush1.bf16.msra.mxu0 0
        %1051 = vmatprep.subr.bf16.mxu0 0
        %1052 = vmatpush1.bf16.msra.mxu0 0
        %1053 = vmatprep.mubr.bf16.mxu0 0
        %1054 = vmatmul.mubr.bf16.gmra.mrb[0].mxu0 %v1019
        %v1055 = vpop.f32.mrb[0].mxu0
        %v1056 = vadd.f32 0.0, %v1055
        %v1057 = vpop.f32.mrb[0].mxu0
        %v1058 = vpop.f32.mrb[0].mxu0
        %v1059 = vadd.f32 0.0, %v1058
        %v1060 = vpop.f32.mrb[0].mxu0
        %1061 = vdwg.mxu0
        %1062 = vst.msk [vmem:[#allocation2] sm:$0xff] %vm583, %v915
        %1063 = vst.msk [vmem:[#allocation2 + $0x8] sm:$0xff] %vm583, %v918
        %1066 = vrot.lane.b32.xlu0 %v962, 8
        %v1067 = vpop.permute.xlu0 %1066
        %1068 = vrot.lane.b32.xlu0 %v965, 8
        %v1069 = vpop.permute.xlu0 %1068
        %vm1072 = vcmask 130112
        %1073 = vst.msk [vmem:[#allocation2] sm:$0xff] %vm1072, %v1067
        %1074 = vst.msk [vmem:[#allocation2 + $0x8] sm:$0xff] %vm1072, %v1069
        %1077 = vrot.lane.b32.xlu0 %v1009, 16
        %v1078 = vpop.permute.xlu0 %1077
        %1079 = vrot.lane.b32.xlu0 %v1012, 16
        %v1080 = vpop.permute.xlu0 %1079
        %vm1083 = vcmask 195712
        %1084 = vst.msk [vmem:[#allocation2] sm:$0xff] %vm1083, %v1078
        %1085 = vst.msk [vmem:[#allocation2 + $0x8] sm:$0xff] %vm1083, %v1080
        %1088 = vrot.lane.b32.xlu0 %v1056, 24
        %v1089 = vpop.permute.xlu0 %1088
        %1090 = vrot.lane.b32.xlu0 %v1059, 24
        %v1091 = vpop.permute.xlu0 %1090
        %vm1094 = vcmask 261312
        %1095 = vst.msk [vmem:[#allocation2] sm:$0xff] %vm1094, %v1089
        %1096 = vst.msk [vmem:[#allocation2 + $0x8] sm:$0xff] %vm1094, %v1091
        %v1097 = vld [vmem:[#allocation2] sm:$0xff]
        %v1098 = vld [vmem:[#allocation2 + $0x8] sm:$0xff]
        %v1099 = vpack.c.bf16 %v1098, %v1097
        %v1100 = vld [vmem:[%s5] sm:$0xf]
        %v1101 = vld [vmem:[%s5 + $0x4] sm:$0xf]
        %v1102 = vld [vmem:[%s5 + $0x8] sm:$0xf]
        %v1103 = vld [vmem:[%s5 + $0xc] sm:$0xf]
        %v1104 = vld [vmem:[%s6] sm:$0x1]
        %v1106 = vlaneseq
        %v1107 = vshrl.u32 %v1106, 7
        %v1108 = vsub.s32 0, %v1107
        %v1109 = vrot.slane %v1104, %v1108
        %v1115 = vunpack.c.l.b16 %v1100
        %v1116 = vunpack.c.l.b16 %v1101
        %v1117 = vunpack.c.l.b16 %v1102
        %v1118 = vunpack.c.l.b16 %v1103
        %v1119 = vpack.c.b16 %v1116, %v1115
        %v1120 = vpack.c.b16 %v1118, %v1117
        %v1124 = vsel %vm444, %v1099, 0
        %1126 = vmatprep.subr.bf16.mxu0 0
        %1127 = vmatpush1.bf16.msra.mxu0 %v1119
        %1128 = vmatprep.subr.bf16.mxu0 0
        %1129 = vmatpush1.bf16.msra.mxu0 %v1120
        %1130 = vmatprep.subr.bf16.mxu0 0
        %1131 = vmatpush1.bf16.msra.mxu0 0
        %1132 = vmatprep.subr.bf16.mxu0 0
        %1133 = vmatpush1.bf16.msra.mxu0 0
        %1134 = vmatprep.subr.bf16.mxu0 0
        %1135 = vmatpush1.bf16.msra.mxu0 0
        %1136 = vmatprep.subr.bf16.mxu0 0
        %1137 = vmatpush1.bf16.msra.mxu0 0
        %1138 = vmatprep.subr.bf16.mxu0 0
        %1139 = vmatpush1.bf16.msra.mxu0 0
        %1140 = vmatprep.subr.bf16.mxu0 0
        %1141 = vmatpush1.bf16.msra.mxu0 0
        %1142 = vmatprep.subr.bf16.mxu0 0
        %1143 = vmatpush1.bf16.msra.mxu0 0
        %1144 = vmatprep.subr.bf16.mxu0 0
        %1145 = vmatpush1.bf16.msra.mxu0 0
        %1146 = vmatprep.subr.bf16.mxu0 0
        %1147 = vmatpush1.bf16.msra.mxu0 0
        %1148 = vmatprep.subr.bf16.mxu0 0
        %1149 = vmatpush1.bf16.msra.mxu0 0
        %1150 = vmatprep.subr.bf16.mxu0 0
        %1151 = vmatpush1.bf16.msra.mxu0 0
        %1152 = vmatprep.subr.bf16.mxu0 0
        %1153 = vmatpush1.bf16.msra.mxu0 0
        %1154 = vmatprep.subr.bf16.mxu0 0
        %1155 = vmatpush1.bf16.msra.mxu0 0
        %1156 = vmatprep.subr.bf16.mxu0 0
        %1157 = vmatpush1.bf16.msra.mxu0 0
        %1158 = vmatprep.mubr.bf16.mxu0 0
        %1159 = vmatmul.mubr.bf16.gmra.mrb[0].mxu0 %v1124
        %v1160 = vpop.f32.mrb[0].mxu0
        %v1161 = vadd.f32 %v1109, %v1160
        %v1162 = vpop.f32.mrb[0].mxu0
        %v1163 = vpop.f32.mrb[0].mxu0
        %v1164 = vadd.f32 %v1109, %v1163
        %v1165 = vpop.f32.mrb[0].mxu0
        %1166 = vdwg.mxu0
        %v1167 = vadd.f32 %v440, %v1161
        %v1168 = vadd.f32 %v441, %v1164
        %v1169 = vld [vmem:[%s7] sm:$0x1]
        %v1170 = vld [vmem:[%s8] sm:$0x1]
        %v1171 = vsel %vm444, %v1167, 0.0
        %1172 = vadd.xlane.f32.xlu0 %v1171
        %v1173 = vpop.xlane.xlu0 %1172
        %v1174 = vsel %vm444, %v1168, 0.0
        %1175 = vadd.xlane.f32.xlu0 %v1174
        %v1176 = vpop.xlane.xlu0 %1175
        %v1177 = vmul.f32 %v1173, %v451
        %v1178 = vmul.f32 %v1176, %v451
        %v1179 = vsub.f32 %v1167, %v1177
        %v1180 = vsub.f32 %v1168, %v1178
        %v1181 = vmul.f32 %v1179, %v1179
        %v1182 = vmul.f32 %v1180, %v1180
        %v1183 = vsel %vm444, %v1181, 0.0
        %1184 = vadd.xlane.f32.xlu0 %v1183
        %v1185 = vpop.xlane.xlu0 %1184
        %v1186 = vsel %vm444, %v1182, 0.0
        %1187 = vadd.xlane.f32.xlu0 %v1186
        %v1188 = vpop.xlane.xlu0 %1187
        %v1189 = vmul.f32 %v1185, %v451
        %v1190 = vmul.f32 %v1188, %v451
        %v1191 = vadd.f32 %v1189, 1e-05
        %v1192 = vadd.f32 %v1190, 1e-05
        %v1193 = vrsqrt.pop %v1191
        %v1194 = vrsqrt.pop %v1192
        %v1195 = vmul.f32 %v1179, %v1193
        %v1196 = vmul.f32 %v1180, %v1194
        %v1198 = vlaneseq
        %v1199 = vshrl.u32 %v1198, 7
        %v1200 = vsub.s32 0, %v1199
        %v1201 = vrot.slane %v1169, %v1200
        %v1203 = vmul.f32 %v1195, %v1201
        %v1204 = vmul.f32 %v1196, %v1201
        %v1206 = vlaneseq
        %v1207 = vshrl.u32 %v1206, 7
        %v1208 = vsub.s32 0, %v1207
        %v1209 = vrot.slane %v1170, %v1208
        %v1211 = vadd.f32 %v1203, %v1209
        %v1212 = vadd.f32 %v1204, %v1209
        %v1213 = vpack.c.bf16 %v1212, %v1211
        %v1214 = vld [vmem:[%s9] sm:$0xf]
        %v1215 = vld [vmem:[%s9 + $0x4] sm:$0xf]
        %v1216 = vld [vmem:[%s9 + $0x8] sm:$0xf]
        %v1217 = vld [vmem:[%s9 + $0xc] sm:$0xf]
        %v1218 = vld [vmem:[%s10] sm:$0x1]
        %v1220 = vlaneseq
        %v1221 = vshrl.u32 %v1220, 7
        %v1222 = vsub.s32 0, %v1221
        %v1223 = vrot.slane %v1218, %v1222
        %v1229 = vunpack.c.l.b16 %v1214
        %v1230 = vunpack.c.l.b16 %v1215
        %v1231 = vunpack.c.l.b16 %v1216
        %v1232 = vunpack.c.l.b16 %v1217
        %v1233 = vpack.c.b16 %v1230, %v1229
        %v1234 = vpack.c.b16 %v1232, %v1231
        %v1238 = vsel %vm444, %v1213, 0
        %1240 = vmatprep.subr.bf16.mxu0 0
        %1241 = vmatpush1.bf16.msra.mxu0 %v1233
        %1242 = vmatprep.subr.bf16.mxu0 0
        %1243 = vmatpush1.bf16.msra.mxu0 %v1234
        %1244 = vmatprep.subr.bf16.mxu0 0
        %1245 = vmatpush1.bf16.msra.mxu0 0
        %1246 = vmatprep.subr.bf16.mxu0 0
        %1247 = vmatpush1.bf16.msra.mxu0 0
        %1248 = vmatprep.subr.bf16.mxu0 0
        %1249 = vmatpush1.bf16.msra.mxu0 0
        %1250 = vmatprep.subr.bf16.mxu0 0
        %1251 = vmatpush1.bf16.msra.mxu0 0
        %1252 = vmatprep.subr.bf16.mxu0 0
        %1253 = vmatpush1.bf16.msra.mxu0 0
        %1254 = vmatprep.subr.bf16.mxu0 0
        %1255 = vmatpush1.bf16.msra.mxu0 0
        %1256 = vmatprep.subr.bf16.mxu0 0
        %1257 = vmatpush1.bf16.msra.mxu0 0
        %1258 = vmatprep.subr.bf16.mxu0 0
        %1259 = vmatpush1.bf16.msra.mxu0 0
        %1260 = vmatprep.subr.bf16.mxu0 0
        %1261 = vmatpush1.bf16.msra.mxu0 0
        %1262 = vmatprep.subr.bf16.mxu0 0
        %1263 = vmatpush1.bf16.msra.mxu0 0
        %1264 = vmatprep.subr.bf16.mxu0 0
        %1265 = vmatpush1.bf16.msra.mxu0 0
        %1266 = vmatprep.subr.bf16.mxu0 0
        %1267 = vmatpush1.bf16.msra.mxu0 0
        %1268 = vmatprep.subr.bf16.mxu0 0
        %1269 = vmatpush1.bf16.msra.mxu0 0
        %1270 = vmatprep.subr.bf16.mxu0 0
        %1271 = vmatpush1.bf16.msra.mxu0 0
        %1272 = vmatprep.mubr.bf16.mxu0 0
        %1273 = vmatmul.mubr.bf16.gmra.mrb[0].mxu0 %v1238
        %v1274 = vpop.f32.mrb[0].mxu0
        %v1275 = vadd.f32 %v1223, %v1274
        %v1276 = vpop.f32.mrb[0].mxu0
        %v1277 = vpop.f32.mrb[0].mxu0
        %v1278 = vadd.f32 %v1223, %v1277
        %v1279 = vpop.f32.mrb[0].mxu0
        %1280 = vdwg.mxu0
        %v1281 = vmul.f32 %v1275, 0.5
        %v1282 = vmul.f32 %v1278, 0.5
        %v1283 = vmul.f32 %v1275, 0.044715
        %v1284 = vmul.f32 %v1278, 0.044715
        %v1285 = vmul.f32 %v1283, %v1275
        %v1286 = vmul.f32 %v1284, %v1278
        %v1287 = vmul.f32 %v1285, %v1275
        %v1288 = vmul.f32 %v1286, %v1278
        %v1289 = vadd.f32 %v1275, %v1287
        %v1290 = vadd.f32 %v1278, %v1288
        %v1291 = vmul.f32 %v1289, 0.7978846
        %v1292 = vmul.f32 %v1290, 0.7978846
        %v1293 = vtanh.pop %v1291
        %v1294 = vtanh.pop %v1292
        %v1295 = vadd.f32 %v1293, 1.0
        %v1296 = vadd.f32 %v1294, 1.0
        %v1297 = vmul.f32 %v1281, %v1295
        %v1298 = vmul.f32 %v1282, %v1296
        %v1299 = vpack.c.bf16 %v1298, %v1297
        %v1300 = vld [vmem:[%s11] sm:$0xf]
        %v1301 = vld [vmem:[%s11 + $0x4] sm:$0xf]
        %v1302 = vld [vmem:[%s11 + $0x8] sm:$0xf]
        %v1303 = vld [vmem:[%s11 + $0xc] sm:$0xf]
        %v1304 = vld [vmem:[%s11 + $0x10] sm:$0xf]
        %v1305 = vld [vmem:[%s11 + $0x14] sm:$0xf]
        %v1306 = vld [vmem:[%s11 + $0x18] sm:$0xf]
        %v1307 = vld [vmem:[%s11 + $0x1c] sm:$0xf]
        %v1308 = vld [vmem:[%s11 + $0x20] sm:$0xf]
        %v1309 = vld [vmem:[%s11 + $0x24] sm:$0xf]
        %v1310 = vld [vmem:[%s11 + $0x28] sm:$0xf]
        %v1311 = vld [vmem:[%s11 + $0x2c] sm:$0xf]
        %v1312 = vld [vmem:[%s11 + $0x30] sm:$0xf]
        %v1313 = vld [vmem:[%s11 + $0x34] sm:$0xf]
        %v1314 = vld [vmem:[%s11 + $0x38] sm:$0xf]
        %v1315 = vld [vmem:[%s11 + $0x3c] sm:$0xf]
        %v1316 = vld [vmem:[%s12] sm:$0x1]
        %v1318 = vlaneseq
        %v1319 = vshrl.u32 %v1318, 7
        %v1320 = vsub.s32 0, %v1319
        %v1321 = vrot.slane %v1316, %v1320
        %v1339 = vunpack.c.l.b16 %v1300
        %v1340 = vunpack.c.l.b16 %v1301
        %v1341 = vunpack.c.l.b16 %v1302
        %v1342 = vunpack.c.l.b16 %v1303
        %v1343 = vunpack.c.l.b16 %v1304
        %v1344 = vunpack.c.l.b16 %v1305
        %v1345 = vunpack.c.l.b16 %v1306
        %v1346 = vunpack.c.l.b16 %v1307
        %v1347 = vunpack.c.l.b16 %v1308
        %v1348 = vunpack.c.l.b16 %v1309
        %v1349 = vunpack.c.l.b16 %v1310
        %v1350 = vunpack.c.l.b16 %v1311
        %v1351 = vunpack.c.l.b16 %v1312
        %v1352 = vunpack.c.l.b16 %v1313
        %v1353 = vunpack.c.l.b16 %v1314
        %v1354 = vunpack.c.l.b16 %v1315
        %v1355 = vpack.c.b16 %v1340, %v1339
        %v1356 = vpack.c.b16 %v1342, %v1341
        %v1357 = vpack.c.b16 %v1344, %v1343
        %v1358 = vpack.c.b16 %v1346, %v1345
        %v1359 = vpack.c.b16 %v1348, %v1347
        %v1360 = vpack.c.b16 %v1350, %v1349
        %v1361 = vpack.c.b16 %v1352, %v1351
        %v1362 = vpack.c.b16 %v1354, %v1353
        %1371 = vmatprep.subr.bf16.mxu0 0
        %1372 = vmatpush1.bf16.msra.mxu0 %v1355
        %1373 = vmatprep.subr.bf16.mxu0 0
        %1374 = vmatpush1.bf16.msra.mxu0 %v1356
        %1375 = vmatprep.subr.bf16.mxu0 0
        %1376 = vmatpush1.bf16.msra.mxu0 %v1357
        %1377 = vmatprep.subr.bf16.mxu0 0
        %1378 = vmatpush1.bf16.msra.mxu0 %v1358
        %1379 = vmatprep.subr.bf16.mxu0 0
        %1380 = vmatpush1.bf16.msra.mxu0 %v1359
        %1381 = vmatprep.subr.bf16.mxu0 0
        %1382 = vmatpush1.bf16.msra.mxu0 %v1360
        %1383 = vmatprep.subr.bf16.mxu0 0
        %1384 = vmatpush1.bf16.msra.mxu0 %v1361
        %1385 = vmatprep.subr.bf16.mxu0 0
        %1386 = vmatpush1.bf16.msra.mxu0 %v1362
        %1387 = vmatprep.subr.bf16.mxu0 0
        %1388 = vmatpush1.bf16.msra.mxu0 0
        %1389 = vmatprep.subr.bf16.mxu0 0
        %1390 = vmatpush1.bf16.msra.mxu0 0
        %1391 = vmatprep.subr.bf16.mxu0 0
        %1392 = vmatpush1.bf16.msra.mxu0 0
        %1393 = vmatprep.subr.bf16.mxu0 0
        %1394 = vmatpush1.bf16.msra.mxu0 0
        %1395 = vmatprep.subr.bf16.mxu0 0
        %1396 = vmatpush1.bf16.msra.mxu0 0
        %1397 = vmatprep.subr.bf16.mxu0 0
        %1398 = vmatpush1.bf16.msra.mxu0 0
        %1399 = vmatprep.subr.bf16.mxu0 0
        %1400 = vmatpush1.bf16.msra.mxu0 0
        %1401 = vmatprep.subr.bf16.mxu0 0
        %1402 = vmatpush1.bf16.msra.mxu0 0
        %1403 = vmatprep.mubr.bf16.mxu0 0
        %1404 = vmatmul.mubr.bf16.gmra.mrb[0].mxu0 %v1299
        %v1405 = vpop.f32.mrb[0].mxu0
        %v1406 = vadd.f32 %v1321, %v1405
        %v1407 = vpop.f32.mrb[0].mxu0
        %v1408 = vpop.f32.mrb[0].mxu0
        %v1409 = vadd.f32 %v1321, %v1408
        %v1410 = vpop.f32.mrb[0].mxu0
        %1411 = vdwg.mxu0
        %v1412 = vadd.f32 %v1167, %v1406
        %v1413 = vadd.f32 %v1168, %v1409
        %1414 = vst.msk [vmem:[%s433] sm:$0xff] %vm444, %v1412
        %1415 = vst.msk [vmem:[%s433 + $0x8] sm:$0xff] %vm444, %v1413
        %s1416 = sand.u32 %s313, 1
        %s1417 = scalar_lea.sflag [#allocation4], %s1416
        %s1418 = sand.u32 %s313, 1
        %s1419 = smul.addr %s1418, 16
        %s1420 = scalar_lea.vmem [#allocation3], %s1419
        // Predicated region
        $region73: #{tpu_custom_call.1} parent=71 // pred_check
          %p1421 = pneg %p323
        $region74: #{tpu_custom_call.1} parent=71 // pred_check_branch
          %1423 = sbr.rel (%p1421) target = $region76
        $region75: #{tpu_custom_call.1} parent=71 // pred_region
          %s1425 = ssub.s32 256, 256
          %1426 = vsyncadd %s1417, %s1425
          %s1427 = smul.addr %s27, 2
          %s1428 = smul.addr %s1427, 128
          %s1429 = scalar_lea.hbm %s13, %s1428
          %s1430 = sshll.u32 %s1420, 4
          %s1431 = int_to_ptr.vmem [resolvable:$true] %s1430
          %1436 = dma.vmem_to_hbm [thread:$0]  %s1431, 256, %s1429, %s1417, 128, 128, 8
        $region76: #{tpu_custom_call.1} parent=71 // pred_fallthru
          _
      $region72: #{tpu_custom_call.1} parent=5 // pred_fallthru
        _
      %p1437 = scmp.le.s32.totalorder 2, %s22
      // Predicated region
      $region77: #{tpu_custom_call.1} parent=5 // pred_check
        %p1438 = pneg %p1437
      $region78: #{tpu_custom_call.1} parent=5 // pred_check_branch
        %1440 = sbr.rel (%p1438) target = $region80
      $region79: #{tpu_custom_call.1} parent=5 // pred_region
        %s1441 = ssub.s32 %s22, 2
        // Predicated region
        $region81: #{tpu_custom_call.1} parent=79 // pred_check
          %p1442 = pneg %p329
        $region82: #{tpu_custom_call.1} parent=79 // pred_check_branch
          %1444 = sbr.rel (%p1442) target = $region84
        $region83: #{tpu_custom_call.1} parent=79 // pred_region
          %s1445 = sand.u32 %s314, 1
          %s1446 = scalar_lea.sflag [#allocation4], %s1445
          %s1447 = sand.u32 %s314, 1
          %s1448 = smul.addr %s1447, 16
          %s1449 = scalar_lea.vmem [#allocation3], %s1448
          %1450 = dma.done %s1446, 256
        $region84: #{tpu_custom_call.1} parent=79 // pred_fallthru
          _
      $region80: #{tpu_custom_call.1} parent=5 // pred_fallthru
        _
    $region6: #{tpu_custom_call.1} parent=1 // loop_footer
      %s26 = sadd.s32 1, %s22
    $region7: #{tpu_custom_call.1} parent=1 // loop_footer_branch
      %21 = sbr.rel target = $region3
    $region8: #{tpu_custom_call.1} parent=1 // loop_exit
      _
    %1451 = vsyncpa [#allocation4], 1
    %s1452 = scalar_lea.sflag [#allocation4], 1
    %1453 = vsyncpa %s1452, 1

</llo_original>
